<compile_context>
chip_gen: v5e
topology: v5e:2x2
jax: 0.10.0
libtpu: 0.0.40
codegen_flags: <defaults>
</compile_context>

<pallas_src>
import jax
import jax.numpy as jnp
from jax.experimental import pallas as pl
from jax.experimental.pallas import tpu as pltpu


def _round_up(x, m):
    return (x + m - 1) // m * m


def _choose_tile(n):
    """Largest tile in {512, 256} that does not inflate the padded size."""
    best_t, best_pad = None, None
    for t in (512, 256):
        pad = _round_up(n, t)
        if best_pad is None or pad < best_pad:
            best_t, best_pad = t, pad
    return best_t, best_pad


# ---------------------------------------------------------------------------
# Fused Pallas kernel
# ---------------------------------------------------------------------------
def _fused_gcn_kernel(adj_ref, x_ref, w1_ref, b1_ref, w2_ref, b2_ref,
                      pool_ref, linw_ref, linb_ref, out_ref,
                      z_ref, h_ref, acc_ref, pooled_ref):
    l = pl.program_id(0)   # layer
    i = pl.program_id(1)   # output row tile
    k = pl.program_id(2)   # contraction (adjacency column) tile
    n_l = pl.num_programs(0)
    n_i = pl.num_programs(1)
    n_k = pl.num_programs(2)

    tm = adj_ref.shape[0]
    tk = adj_ref.shape[1]
    k_rows = pl.multiple_of(k * tk, tk)

    # ---- per-layer projection Z = H_prev @ W, tiled over k and computed
    #      during the i == 0 sweep so it overlaps with the adjacency stream.
    @pl.when(i == 0)
    def _project():
        @pl.when(l == 0)
        def _():
            z_ref[pl.ds(k_rows, tk), :] = jnp.dot(
                x_ref[...], w1_ref[...],
                preferred_element_type=jnp.float32).astype(z_ref.dtype)

        @pl.when(l > 0)
        def _():
            z_ref[pl.ds(k_rows, tk), :] = jnp.dot(
                h_ref[pl.ds(k_rows, tk), :], w2_ref[...],
                preferred_element_type=jnp.float32).astype(z_ref.dtype)

    # ---- streamed adjacency reduction into the f32 row-tile accumulator
    @pl.when(k == 0)
    def _init():
        acc_ref[...] = jnp.zeros_like(acc_ref)

    acc_ref[...] += jnp.dot(adj_ref[...], z_ref[pl.ds(k_rows, tk), :],
                            preferred_element_type=jnp.float32)

    # ---- row-tile finalize: bias + ReLU into resident H; fold the mean-pool
    #      of the last layer's rows into the pooled accumulator.
    @pl.when(k == n_k - 1)
    def _finalize():
        bias = jnp.where(l == 0, b1_ref[...], b2_ref[...])
        h_tile = jnp.maximum(acc_ref[...] + bias, 0.0)
        row_start = pl.multiple_of(i * tm, tm)
        h_ref[pl.ds(row_start, tm), :] = h_tile.astype(h_ref.dtype)

        @pl.when(l == n_l - 1)
        def _pool():
            @pl.when(i == 0)
            def _():
                pooled_ref[...] = jnp.zeros_like(pooled_ref)

            pooled_ref[...] += jnp.dot(pool_ref[...], h_tile,
                                       preferred_element_type=jnp.float32)

    # ---- very last grid step: final linear (dropout in eval = identity)
    @pl.when((l == n_l - 1) & (i == n_i - 1) & (k == n_k - 1))
    def _epilogue():
        out_ref[...] = (jnp.dot(pooled_ref[...], linw_ref[...],
                                preferred_element_type=jnp.float32)
                        + linb_ref[...])


def fused_gcn_forward(adj, x, params, pool):
    assert len(params["convs"]) == 2, "fused kernel is specialized to num_layers=2"
    (w1, b1), (w2, b2) = params["convs"]
    lin_w, lin_b = params["lin_w"], params["lin_b"]

    n = adj.shape[0]
    g = pool.shape[0]
    f = w1.shape[0]
    h = w1.shape[1]
    c = lin_w.shape[1]

    tile, n_pad = _choose_tile(n)
    tm = tk = tile
    f_pad = _round_up(f, 128)
    h_pad = _round_up(h, 128)
    c_pad = _round_up(c, 128)
    g_pad = _round_up(g, 8)

    # Streamed operands in bf16 (half the HBM bytes, full-rate MXU for the
    # dominant A @ Z reduction); weights stay f32, accumulation is f32.
    adj_p = (jnp.zeros((n_pad, n_pad), jnp.float32)
             .at[:n, :n].set(adj).astype(jnp.bfloat16))
    x_p = (jnp.zeros((n_pad, f_pad), jnp.float32)
           .at[:n, :f].set(x).astype(jnp.bfloat16))
    pool_p = (jnp.zeros((g_pad, n_pad), jnp.float32)
              .at[:g, :n].set(pool).astype(jnp.bfloat16))
    w1_p = jnp.zeros((f_pad, h_pad), jnp.float32).at[:f, :h].set(w1)
    b1_p = jnp.zeros((1, h_pad), jnp.float32).at[:, :h].set(b1)
    w2_p = jnp.zeros((h_pad, h_pad), jnp.float32).at[:h, :h].set(w2)
    b2_p = jnp.zeros((1, h_pad), jnp.float32).at[:, :h].set(b2)
    linw_p = jnp.zeros((h_pad, c_pad), jnp.float32).at[:h, :c].set(lin_w)
    linb_p = jnp.zeros((1, c_pad), jnp.float32).at[:, :c].set(lin_b)

    num_layers = 2
    n_tiles = n_pad // tile
    grid = (num_layers, n_tiles, n_tiles)

    # ---- VMEM budget: working set + headroom, capped by physical VMEM.
    scratch_bytes = (2 * n_pad * h_pad * 2          # Z + H (bf16)
                     + tm * h_pad * 4               # row-tile accumulator
                     + g_pad * h_pad * 4)           # pooled accumulator
    stream_bytes = 2 * 2 * (tm * tk                 # adj tile (double-buffered)
                            + tk * f_pad            # X row block
                            + g_pad * tm)           # pool column block
    weight_bytes = 2 * 4 * (f_pad * h_pad + h_pad * h_pad + h_pad * c_pad
                            + 2 * h_pad + c_pad)
    out_bytes = 2 * g_pad * c_pad * 4
    needed = scratch_bytes + stream_bytes + weight_bytes + out_bytes
    try:
        vmem_cap = int(pltpu.get_tpu_info().vmem_capacity_bytes)
    except Exception:
        vmem_cap = 64 * 1024 * 1024                 # conservative (v7x) fallback
    vmem_limit = int(min(max(needed * 5 // 4 + (4 << 20), 32 << 20),
                         vmem_cap * 85 // 100))

    flops = (2 * n_pad * f_pad * h_pad + 2 * n_pad * h_pad * h_pad
             + 2 * num_layers * n_pad * n_pad * h_pad
             + 2 * g_pad * n_pad * h_pad + 2 * g_pad * h_pad * c_pad)
    bytes_accessed = (num_layers * n_pad * n_pad * 2        # bf16 A per layer
                      + n_pad * f_pad * 2 + g_pad * n_pad * 2
                      + (f_pad * h_pad + h_pad * h_pad + h_pad * c_pad
                         + 2 * h_pad + c_pad) * 4
                      + g_pad * c_pad * 4)

    def _x_index_map(l, i, k):
        # X row blocks are only consumed during the (layer 0, i == 0) sweep;
        # keep the block index constant elsewhere so no redundant DMA fires.
        return (jnp.where((l == 0) & (i == 0), k, 0), 0)

    out_p = pl.pallas_call(
        _fused_gcn_kernel,
        out_shape=jax.ShapeDtypeStruct((g_pad, c_pad), jnp.float32),
        grid_spec=pltpu.PrefetchScalarGridSpec(
            num_scalar_prefetch=0,
            grid=grid,
            in_specs=[
                pl.BlockSpec((tm, tk), lambda l, i, k: (i, k)),        # A tiles
                pl.BlockSpec((tk, f_pad), _x_index_map),               # X row blocks
                pl.BlockSpec((f_pad, h_pad), lambda l, i, k: (0, 0)),  # W1
                pl.BlockSpec((1, h_pad), lambda l, i, k: (0, 0)),      # b1
                pl.BlockSpec((h_pad, h_pad), lambda l, i, k: (0, 0)),  # W2
                pl.BlockSpec((1, h_pad), lambda l, i, k: (0, 0)),      # b2
                pl.BlockSpec((g_pad, tm), lambda l, i, k: (0, i)),     # pool cols
                pl.BlockSpec((h_pad, c_pad), lambda l, i, k: (0, 0)),  # lin_w
                pl.BlockSpec((1, c_pad), lambda l, i, k: (0, 0)),      # lin_b
            ],
            out_specs=pl.BlockSpec((g_pad, c_pad), lambda l, i, k: (0, 0)),
            scratch_shapes=[
                pltpu.VMEM((n_pad, h_pad), jnp.bfloat16),  # Z = H_prev @ W
                pltpu.VMEM((n_pad, h_pad), jnp.bfloat16),  # H (resident acts)
                pltpu.VMEM((tm, h_pad), jnp.float32),      # row-tile accumulator
                pltpu.VMEM((g_pad, h_pad), jnp.float32),   # pooled accumulator
            ],
        ),
        compiler_params=pltpu.CompilerParams(
            # Fused layers / shared resident H forbid core-parallel axes.
            dimension_semantics=("arbitrary", "arbitrary", "arbitrary"),
            vmem_limit_bytes=vmem_limit,
        ),
        cost_estimate=pl.CostEstimate(
            flops=flops, transcendentals=0, bytes_accessed=bytes_accessed),
    )(adj_p, x_p, w1_p, b1_p, w2_p, b2_p, pool_p, linw_p, linb_p)

    return out_p[:g, :c]


# ---------------------------------------------------------------------------
# Plain-JAX glue: dense normalized adjacency & pooling matrix
# ---------------------------------------------------------------------------
def build_normalized_adj(edge_index, num_nodes):
    src, dst = edge_index[0], edge_index[1]
    a = jnp.zeros((num_nodes, num_nodes), jnp.float32)
    a = a.at[dst, src].set(1.0)                        # message src -> dst
    idx = jnp.arange(num_nodes)
    a = a.at[idx, idx].set(1.0)                        # add remaining self loops
    deg = a.sum(axis=1)
    dinv = jnp.where(deg > 0, 1.0 / jnp.sqrt(deg), 0.0)
    return dinv[:, None] * a * dinv[None, :]


def build_pool_matrix(batch, num_graphs, num_nodes):
    onehot = (batch[None, :] == jnp.arange(num_graphs)[:, None]).astype(jnp.float32)
    counts = jnp.maximum(onehot.sum(axis=1, keepdims=True), 1.0)
    return onehot / counts  # [G, N]


# ---------------------------------------------------------------------------
# GCN forward (eval mode: dropout is identity)
# ---------------------------------------------------------------------------
def gcn_forward(params, x, edge_index, batch, num_graphs):
    n = x.shape[0]
    adj = build_normalized_adj(edge_index, n)
    pool = build_pool_matrix(batch, num_graphs, n)
    return fused_gcn_forward(adj, x, params, pool)


def init_params(key, num_features, hidden_channels, num_classes, num_layers=2):
    keys = jax.random.split(key, num_layers + 1)
    convs = []
    for i in range(num_layers):
        in_c = num_features if i == 0 else hidden_channels
        kw, kb = jax.random.split(keys[i])
        scale = 1.0 / jnp.sqrt(jnp.float32(in_c))
        w = jax.random.uniform(kw, (in_c, hidden_channels), jnp.float32, -scale, scale)
        b = jax.random.uniform(kb, (1, hidden_channels), jnp.float32, -scale, scale)
        convs.append((w, b))
    kw, kb = jax.random.split(keys[-1])
    scale = 1.0 / jnp.sqrt(jnp.float32(hidden_channels))
    lin_w = jax.random.uniform(kw, (hidden_channels, num_classes), jnp.float32, -scale, scale)
    lin_b = jax.random.uniform(kb, (1, num_classes), jnp.float32, -scale, scale)
    return {"convs": convs, "lin_w": lin_w, "lin_b": lin_b}


# ---------------------------------------------------------------------------
def _reference(params, x, edge_index, batch, num_graphs):
    n = x.shape[0]
    adj = build_normalized_adj(edge_index, n)
    pool = build_pool_matrix(batch, num_graphs, n)
    h = x
    for (w, b) in params["convs"]:
        h = jnp.maximum(adj @ h @ w + b, 0.0)
    return (pool @ h) @ params["lin_w"] + params["lin_b"]


if __name__ == "__main__":
    num_nodes = 600          # tile=256 -> n_pad=768 -> 3x3 tiles x 2 layers
    num_features = 8
    hidden_channels = 32
    num_classes = 4
    num_graphs = 3

    key = jax.random.PRNGKey(0)
    k_x, k_e, k_p = jax.random.split(key, 3)

    x = jax.random.normal(k_x, (num_nodes, num_features), jnp.float32)
    num_edges = 2400
    edge_index = jax.random.randint(k_e, (2, num_edges), 0, num_nodes, jnp.int32)
    nodes_per_graph = num_nodes // num_graphs
    batch = jnp.minimum(jnp.arange(num_nodes) // nodes_per_graph,
                        num_graphs - 1).astype(jnp.int32)

    params = init_params(k_p, num_features, hidden_channels, num_classes, num_layers=2)

    out = gcn_forward(params, x, edge_index, batch, num_graphs)
    out = jax.block_until_ready(out)

    ref = _reference(params, x, edge_index, batch, num_graphs)
    assert out.shape == (num_graphs, num_classes)
    # bf16 adjacency / X / pool / resident H,Z with f32 accumulation -> loose tol
    assert jnp.allclose(out, ref, atol=5e-2, rtol=5e-2), (
        "mismatch vs JAX reference: max abs err "
        f"{jnp.max(jnp.abs(out - ref)):.3e}")

    print("KERNEL_OK")
</pallas_src>

<mosaic_0001>
module attributes {stable_mosaic.version = 11 : i64} {
  func.func @_fused_gcn_kernel(%arg0: i32, %arg1: i32, %arg2: i32, %arg3: memref<256x256xbf16, #tpu.memory_space<vmem>>, %arg4: memref<256x128xbf16, #tpu.memory_space<vmem>>, %arg5: memref<128x128xf32, #tpu.memory_space<vmem>>, %arg6: memref<1x128xf32, #tpu.memory_space<vmem>>, %arg7: memref<128x128xf32, #tpu.memory_space<vmem>>, %arg8: memref<1x128xf32, #tpu.memory_space<vmem>>, %arg9: memref<8x256xbf16, #tpu.memory_space<vmem>>, %arg10: memref<128x128xf32, #tpu.memory_space<vmem>>, %arg11: memref<1x128xf32, #tpu.memory_space<vmem>>, %arg12: memref<8x128xf32, #tpu.memory_space<vmem>>, %arg13: memref<768x128xbf16, #tpu.memory_space<vmem>>, %arg14: memref<768x128xbf16, #tpu.memory_space<vmem>>, %arg15: memref<256x128xf32, #tpu.memory_space<vmem>>, %arg16: memref<8x128xf32, #tpu.memory_space<vmem>>) attributes {dimension_semantics = [#tpu.dimension_semantics<arbitrary>, #tpu.dimension_semantics<arbitrary>, #tpu.dimension_semantics<arbitrary>], iteration_bounds = array<i64: 2, 3, 3>, scalar_prefetch = 0 : i64, scratch_operands = 4 : i64, tpu.core_type = #tpu.core_type<tc>, window_params = [{transform_indices = @transform_0, window_bounds = array<i64: 256, 256>}, {transform_indices = @transform_1, window_bounds = array<i64: 256, 128>}, {pipeline_mode = #tpu.pipeline_mode<synchronous>, transform_indices = @transform_2, window_bounds = array<i64: 128, 128>}, {pipeline_mode = #tpu.pipeline_mode<synchronous>, transform_indices = @transform_3, window_bounds = array<i64: 1, 128>}, {pipeline_mode = #tpu.pipeline_mode<synchronous>, transform_indices = @transform_4, window_bounds = array<i64: 128, 128>}, {pipeline_mode = #tpu.pipeline_mode<synchronous>, transform_indices = @transform_5, window_bounds = array<i64: 1, 128>}, {transform_indices = @transform_6, window_bounds = array<i64: 8, 256>}, {pipeline_mode = #tpu.pipeline_mode<synchronous>, transform_indices = @transform_7, window_bounds = array<i64: 128, 128>}, {pipeline_mode = #tpu.pipeline_mode<synchronous>, transform_indices = @transform_8, window_bounds = array<i64: 1, 128>}, {pipeline_mode = #tpu.pipeline_mode<synchronous>, transform_indices = @transform_9, window_bounds = array<i64: 8, 128>}]} {
    %c256_i32 = arith.constant 256 : i32
    %0 = arith.muli %arg2, %c256_i32 : i32
    %1 = tpu.assume_multiple %0, 256 : i32
    %c0_i32 = arith.constant 0 : i32
    %2 = arith.cmpi eq, %arg1, %c0_i32 : i32
    %3 = arith.extui %2 : i1 to i32
    %c0_i32_0 = arith.constant 0 : i32
    %4 = arith.cmpi ne, %3, %c0_i32_0 : i32
    scf.if %4 {
      %c0_i32_13 = arith.constant 0 : i32
      %25 = arith.cmpi eq, %arg0, %c0_i32_13 : i32
      %26 = arith.extui %25 : i1 to i32
      %c0_i32_14 = arith.constant 0 : i32
      %27 = arith.cmpi ne, %26, %c0_i32_14 : i32
      scf.if %27 {
        %c0_17 = arith.constant 0 : index
        %c0_18 = arith.constant 0 : index
        %31 = vector.load %arg4[%c0_17, %c0_18] : memref<256x128xbf16, #tpu.memory_space<vmem>>, vector<256x128xbf16>
        %c0_19 = arith.constant 0 : index
        %c0_20 = arith.constant 0 : index
        %32 = vector.load %arg5[%c0_19, %c0_20] : memref<128x128xf32, #tpu.memory_space<vmem>>, vector<128x128xf32>
        %cst_21 = arith.constant dense<0.000000e+00> : vector<256x128xf32>
        %33 = tpu.matmul %31, %32, %cst_21 {dimension_numbers = #tpu.dot_dimension_numbers<[1], [0], [0], [1], [0, 0, 1, 1], [], []>} : vector<256x128xbf16>, vector<128x128xf32>, vector<256x128xf32> -> vector<256x128xf32>
        %34 = arith.truncf %33 : vector<256x128xf32> to vector<256x128xbf16>
        %35 = arith.index_cast %1 : i32 to index
        %c0_22 = arith.constant 0 : index
        %36 = vector.load %arg13[%35, %c0_22] : memref<768x128xbf16, #tpu.memory_space<vmem>>, vector<256x128xbf16>
        tpu.vector_store %arg13[%35, %c0_22], %34 {strides = array<i32>} : memref<768x128xbf16, #tpu.memory_space<vmem>>, vector<256x128xbf16>,
      } else {
      }
      %c0_i32_15 = arith.constant 0 : i32
      %28 = arith.cmpi sgt, %arg0, %c0_i32_15 : i32
      %29 = arith.extui %28 : i1 to i32
      %c0_i32_16 = arith.constant 0 : i32
      %30 = arith.cmpi ne, %29, %c0_i32_16 : i32
      scf.if %30 {
        %31 = arith.index_cast %1 : i32 to index
        %c0_17 = arith.constant 0 : index
        %32 = vector.load %arg14[%31, %c0_17] : memref<768x128xbf16, #tpu.memory_space<vmem>>, vector<256x128xbf16>
        %c0_18 = arith.constant 0 : index
        %c0_19 = arith.constant 0 : index
        %33 = vector.load %arg7[%c0_18, %c0_19] : memref<128x128xf32, #tpu.memory_space<vmem>>, vector<128x128xf32>
        %cst_20 = arith.constant dense<0.000000e+00> : vector<256x128xf32>
        %34 = tpu.matmul %32, %33, %cst_20 {dimension_numbers = #tpu.dot_dimension_numbers<[1], [0], [0], [1], [0, 0, 1, 1], [], []>} : vector<256x128xbf16>, vector<128x128xf32>, vector<256x128xf32> -> vector<256x128xf32>
        %35 = arith.truncf %34 : vector<256x128xf32> to vector<256x128xbf16>
        %36 = arith.index_cast %1 : i32 to index
        %c0_21 = arith.constant 0 : index
        %37 = vector.load %arg13[%36, %c0_21] : memref<768x128xbf16, #tpu.memory_space<vmem>>, vector<256x128xbf16>
        tpu.vector_store %arg13[%36, %c0_21], %35 {strides = array<i32>} : memref<768x128xbf16, #tpu.memory_space<vmem>>, vector<256x128xbf16>,
      } else {
      }
    } else {
    }
    %c0_i32_1 = arith.constant 0 : i32
    %5 = arith.cmpi eq, %arg2, %c0_i32_1 : i32
    %6 = arith.extui %5 : i1 to i32
    %c0_i32_2 = arith.constant 0 : i32
    %7 = arith.cmpi ne, %6, %c0_i32_2 : i32
    scf.if %7 {
      %cst_13 = arith.constant 0.000000e+00 : f32
      %25 = vector.broadcast %cst_13 : f32 to vector<256x128xf32>
      %c0_14 = arith.constant 0 : index
      %c0_15 = arith.constant 0 : index
      %26 = vector.load %arg15[%c0_14, %c0_15] : memref<256x128xf32, #tpu.memory_space<vmem>>, vector<256x128xf32>
      tpu.vector_store %arg15[%c0_14, %c0_15], %25 {strides = array<i32>} : memref<256x128xf32, #tpu.memory_space<vmem>>, vector<256x128xf32>,
    } else {
    }
    %c0 = arith.constant 0 : index
    %c0_3 = arith.constant 0 : index
    %8 = vector.load %arg15[%c0, %c0_3] : memref<256x128xf32, #tpu.memory_space<vmem>>, vector<256x128xf32>
    %c0_4 = arith.constant 0 : index
    %c0_5 = arith.constant 0 : index
    %9 = vector.load %arg3[%c0_4, %c0_5] : memref<256x256xbf16, #tpu.memory_space<vmem>>, vector<256x256xbf16>
    %10 = arith.index_cast %1 : i32 to index
    %c0_6 = arith.constant 0 : index
    %11 = vector.load %arg13[%10, %c0_6] : memref<768x128xbf16, #tpu.memory_space<vmem>>, vector<256x128xbf16>
    %cst = arith.constant dense<0.000000e+00> : vector<256x128xf32>
    %12 = tpu.matmul %9, %11, %cst {dimension_numbers = #tpu.dot_dimension_numbers<[1], [0], [0], [1], [0, 0, 1, 1], [], []>} : vector<256x256xbf16>, vector<256x128xbf16>, vector<256x128xf32> -> vector<256x128xf32>
    %13 = arith.addf %8, %12 : vector<256x128xf32>
    %c0_7 = arith.constant 0 : index
    %c0_8 = arith.constant 0 : index
    %14 = vector.load %arg15[%c0_7, %c0_8] : memref<256x128xf32, #tpu.memory_space<vmem>>, vector<256x128xf32>
    tpu.vector_store %arg15[%c0_7, %c0_8], %13 {strides = array<i32>} : memref<256x128xf32, #tpu.memory_space<vmem>>, vector<256x128xf32>,
    %c2_i32 = arith.constant 2 : i32
    %15 = arith.cmpi eq, %arg2, %c2_i32 : i32
    %16 = arith.extui %15 : i1 to i32
    %c0_i32_9 = arith.constant 0 : i32
    %17 = arith.cmpi ne, %16, %c0_i32_9 : i32
    scf.if %17 {
      %c0_i32_13 = arith.constant 0 : i32
      %25 = arith.cmpi eq, %arg0, %c0_i32_13 : i32
      %c0_14 = arith.constant 0 : index
      %c0_15 = arith.constant 0 : index
      %26 = vector.load %arg6[%c0_14, %c0_15] : memref<1x128xf32, #tpu.memory_space<vmem>>, vector<1x128xf32>
      %c0_16 = arith.constant 0 : index
      %c0_17 = arith.constant 0 : index
      %27 = vector.load %arg8[%c0_16, %c0_17] : memref<1x128xf32, #tpu.memory_space<vmem>>, vector<1x128xf32>
      %28 = arith.select %25, %26, %27 : vector<1x128xf32>
      %c0_18 = arith.constant 0 : index
      %c0_19 = arith.constant 0 : index
      %29 = vector.load %arg15[%c0_18, %c0_19] : memref<256x128xf32, #tpu.memory_space<vmem>>, vector<256x128xf32>
      %30 = vector.broadcast %28 : vector<1x128xf32> to vector<256x128xf32>
      %31 = arith.addf %29, %30 : vector<256x128xf32>
      %cst_20 = arith.constant 0.000000e+00 : f32
      %32 = vector.broadcast %cst_20 : f32 to vector<256x128xf32>
      %33 = arith.maximumf %31, %32 : vector<256x128xf32>
      %c256_i32_21 = arith.constant 256 : i32
      %34 = arith.muli %arg1, %c256_i32_21 : i32
      %35 = tpu.assume_multiple %34, 256 : i32
      %36 = arith.truncf %33 : vector<256x128xf32> to vector<256x128xbf16>
      %37 = arith.index_cast %35 : i32 to index
      %c0_22 = arith.constant 0 : index
      %38 = vector.load %arg14[%37, %c0_22] : memref<768x128xbf16, #tpu.memory_space<vmem>>, vector<256x128xbf16>
      tpu.vector_store %arg14[%37, %c0_22], %36 {strides = array<i32>} : memref<768x128xbf16, #tpu.memory_space<vmem>>, vector<256x128xbf16>,
      %c1_i32_23 = arith.constant 1 : i32
      %39 = arith.cmpi eq, %arg0, %c1_i32_23 : i32
      %40 = arith.extui %39 : i1 to i32
      %c0_i32_24 = arith.constant 0 : i32
      %41 = arith.cmpi ne, %40, %c0_i32_24 : i32
      scf.if %41 {
        %c0_i32_25 = arith.constant 0 : i32
        %42 = arith.cmpi eq, %arg1, %c0_i32_25 : i32
        %43 = arith.extui %42 : i1 to i32
        %c0_i32_26 = arith.constant 0 : i32
        %44 = arith.cmpi ne, %43, %c0_i32_26 : i32
        scf.if %44 {
          %cst_34 = arith.constant 0.000000e+00 : f32
          %50 = vector.broadcast %cst_34 : f32 to vector<8x128xf32>
          %c0_35 = arith.constant 0 : index
          %c0_36 = arith.constant 0 : index
          %51 = vector.load %arg16[%c0_35, %c0_36] : memref<8x128xf32, #tpu.memory_space<vmem>>, vector<8x128xf32>
          tpu.vector_store %arg16[%c0_35, %c0_36], %50 {strides = array<i32>} : memref<8x128xf32, #tpu.memory_space<vmem>>, vector<8x128xf32>,
        } else {
        }
        %c0_27 = arith.constant 0 : index
        %c0_28 = arith.constant 0 : index
        %45 = vector.load %arg16[%c0_27, %c0_28] : memref<8x128xf32, #tpu.memory_space<vmem>>, vector<8x128xf32>
        %c0_29 = arith.constant 0 : index
        %c0_30 = arith.constant 0 : index
        %46 = vector.load %arg9[%c0_29, %c0_30] : memref<8x256xbf16, #tpu.memory_space<vmem>>, vector<8x256xbf16>
        %cst_31 = arith.constant dense<0.000000e+00> : vector<8x128xf32>
        %47 = tpu.matmul %46, %33, %cst_31 {dimension_numbers = #tpu.dot_dimension_numbers<[1], [0], [0], [1], [0, 0, 1, 1], [], []>} : vector<8x256xbf16>, vector<256x128xf32>, vector<8x128xf32> -> vector<8x128xf32>
        %48 = arith.addf %45, %47 : vector<8x128xf32>
        %c0_32 = arith.constant 0 : index
        %c0_33 = arith.constant 0 : index
        %49 = vector.load %arg16[%c0_32, %c0_33] : memref<8x128xf32, #tpu.memory_space<vmem>>, vector<8x128xf32>
        tpu.vector_store %arg16[%c0_32, %c0_33], %48 {strides = array<i32>} : memref<8x128xf32, #tpu.memory_space<vmem>>, vector<8x128xf32>,
      } else {
      }
    } else {
    }
    %c1_i32 = arith.constant 1 : i32
    %18 = arith.cmpi eq, %arg0, %c1_i32 : i32
    %c2_i32_10 = arith.constant 2 : i32
    %19 = arith.cmpi eq, %arg1, %c2_i32_10 : i32
    %20 = arith.andi %18, %19 : i1
    %c2_i32_11 = arith.constant 2 : i32
    %21 = arith.cmpi eq, %arg2, %c2_i32_11 : i32
    %22 = arith.andi %20, %21 : i1
    %23 = arith.extui %22 : i1 to i32
    %c0_i32_12 = arith.constant 0 : i32
    %24 = arith.cmpi ne, %23, %c0_i32_12 : i32
    scf.if %24 {
      %c0_13 = arith.constant 0 : index
      %c0_14 = arith.constant 0 : index
      %25 = vector.load %arg16[%c0_13, %c0_14] : memref<8x128xf32, #tpu.memory_space<vmem>>, vector<8x128xf32>
      %c0_15 = arith.constant 0 : index
      %c0_16 = arith.constant 0 : index
      %26 = vector.load %arg10[%c0_15, %c0_16] : memref<128x128xf32, #tpu.memory_space<vmem>>, vector<128x128xf32>
      %cst_17 = arith.constant dense<0.000000e+00> : vector<8x128xf32>
      %27 = tpu.matmul %25, %26, %cst_17 {dimension_numbers = #tpu.dot_dimension_numbers<[1], [0], [0], [1], [0, 0, 1, 1], [], []>} : vector<8x128xf32>, vector<128x128xf32>, vector<8x128xf32> -> vector<8x128xf32>
      %c0_18 = arith.constant 0 : index
      %c0_19 = arith.constant 0 : index
      %28 = vector.load %arg11[%c0_18, %c0_19] : memref<1x128xf32, #tpu.memory_space<vmem>>, vector<1x128xf32>
      %29 = vector.broadcast %28 : vector<1x128xf32> to vector<8x128xf32>
      %30 = arith.addf %27, %29 : vector<8x128xf32>
      %c0_20 = arith.constant 0 : index
      %c0_21 = arith.constant 0 : index
      %31 = vector.load %arg12[%c0_20, %c0_21] : memref<8x128xf32, #tpu.memory_space<vmem>>, vector<8x128xf32>
      tpu.vector_store %arg12[%c0_20, %c0_21], %30 {strides = array<i32>} : memref<8x128xf32, #tpu.memory_space<vmem>>, vector<8x128xf32>,
    } else {
    }
    return
  }
  func.func @transform_0(%arg0: i32, %arg1: i32, %arg2: i32) -> (i32, i32) {
    %c0_i32 = arith.constant 0 : i32
    return %arg1, %arg2 : i32, i32
  }
  func.func @transform_1(%arg0: i32, %arg1: i32, %arg2: i32) -> (i32, i32) {
    %c0_i32 = arith.constant 0 : i32
    %0 = arith.cmpi eq, %arg0, %c0_i32 : i32
    %c0_i32_0 = arith.constant 0 : i32
    %1 = arith.cmpi eq, %arg1, %c0_i32_0 : i32
    %2 = arith.andi %0, %1 : i1
    %c0_i32_1 = arith.constant 0 : i32
    %3 = arith.select %2, %arg2, %c0_i32_1 : i32
    %c0_i32_2 = arith.constant 0 : i32
    %c0_i32_3 = arith.constant 0 : i32
    return %3, %c0_i32_2 : i32, i32
  }
  func.func @transform_2(%arg0: i32, %arg1: i32, %arg2: i32) -> (i32, i32) {
    %c0_i32 = arith.constant 0 : i32
    %c0_i32_0 = arith.constant 0 : i32
    %c0_i32_1 = arith.constant 0 : i32
    return %c0_i32, %c0_i32_0 : i32, i32
  }
  func.func @transform_3(%arg0: i32, %arg1: i32, %arg2: i32) -> (i32, i32) {
    %c0_i32 = arith.constant 0 : i32
    %c0_i32_0 = arith.constant 0 : i32
    %c0_i32_1 = arith.constant 0 : i32
    return %c0_i32, %c0_i32_0 : i32, i32
  }
  func.func @transform_4(%arg0: i32, %arg1: i32, %arg2: i32) -> (i32, i32) {
    %c0_i32 = arith.constant 0 : i32
    %c0_i32_0 = arith.constant 0 : i32
    %c0_i32_1 = arith.constant 0 : i32
    return %c0_i32, %c0_i32_0 : i32, i32
  }
  func.func @transform_5(%arg0: i32, %arg1: i32, %arg2: i32) -> (i32, i32) {
    %c0_i32 = arith.constant 0 : i32
    %c0_i32_0 = arith.constant 0 : i32
    %c0_i32_1 = arith.constant 0 : i32
    return %c0_i32, %c0_i32_0 : i32, i32
  }
  func.func @transform_6(%arg0: i32, %arg1: i32, %arg2: i32) -> (i32, i32) {
    %c0_i32 = arith.constant 0 : i32
    %c0_i32_0 = arith.constant 0 : i32
    return %c0_i32, %arg1 : i32, i32
  }
  func.func @transform_7(%arg0: i32, %arg1: i32, %arg2: i32) -> (i32, i32) {
    %c0_i32 = arith.constant 0 : i32
    %c0_i32_0 = arith.constant 0 : i32
    %c0_i32_1 = arith.constant 0 : i32
    return %c0_i32, %c0_i32_0 : i32, i32
  }
  func.func @transform_8(%arg0: i32, %arg1: i32, %arg2: i32) -> (i32, i32) {
    %c0_i32 = arith.constant 0 : i32
    %c0_i32_0 = arith.constant 0 : i32
    %c0_i32_1 = arith.constant 0 : i32
    return %c0_i32, %c0_i32_0 : i32, i32
  }
  func.func @transform_9(%arg0: i32, %arg1: i32, %arg2: i32) -> (i32, i32) {
    %c0_i32 = arith.constant 0 : i32
    %c0_i32_0 = arith.constant 0 : i32
    %c0_i32_1 = arith.constant 0 : i32
    return %c0_i32, %c0_i32_0 : i32, i32
  }
}

</mosaic_0001>

<llo_original>
// kernel: tpu_custom_call.1
$region0: #{tpu_custom_call.1}
  #allocation0 [shape = 'u32[]', space=smem, size = 0x4, offset = 0x4, fixed_abs, tag = 'smem constant byte address 0x4 - core index']
  #allocation1 [shape = 'u32[72,128]{1,0:T(1,128)}', space=vmem, size = 0x9000, scoped, tag = 'internal scratch']
  #allocation2 [shape = 'bf16[768,128]{1,0:T(8,128)(2,1)}', space=vmem, size = 0x30000, scoped, tag = 'scratch operand']
  #allocation3 [shape = 'bf16[768,128]{1,0:T(8,128)(2,1)}', space=vmem, size = 0x30000, scoped, tag = 'scratch operand']
  #allocation4 [shape = 'f32[256,128]{1,0:T(8,128)}', space=vmem, size = 0x20000, scoped, tag = 'scratch operand']
  #allocation5 [shape = 'f32[8,128]{1,0:T(8,128)}', space=vmem, size = 0x1000, scoped, tag = 'scratch operand']
  %s0 = inlined_call_operand.hbm [shape: bf16[768,768], index: 0, kind: input, shape index: {}]
  %s1 = inlined_call_operand.hbm [shape: bf16[768,128], index: 1, kind: input, shape index: {}]
  %s2 = inlined_call_operand.hbm [shape: f32[128,128], index: 2, kind: input, shape index: {}]
  %s3 = inlined_call_operand.hbm [shape: f32[1,128], index: 3, kind: input, shape index: {}]
  %s4 = inlined_call_operand.hbm [shape: f32[128,128], index: 4, kind: input, shape index: {}]
  %s5 = inlined_call_operand.hbm [shape: f32[1,128], index: 5, kind: input, shape index: {}]
  %s6 = inlined_call_operand.hbm [shape: bf16[8,768], index: 6, kind: input, shape index: {}]
  %s7 = inlined_call_operand.hbm [shape: f32[128,128], index: 7, kind: input, shape index: {}]
  %s8 = inlined_call_operand.hbm [shape: f32[1,128], index: 8, kind: input, shape index: {}]
  %s9 = inlined_call_operand.hbm [shape: f32[8,128], index: 9, kind: output, shape index: {}]
  %s10 = sld [smem:[#allocation0]]
  $region137: #{tpu_custom_call.1} parent=0
    _
  %s12 = ssub.s32 1, %s10
  %s13 = scalar_select 0, %s12, %s10
  $region1: #{tpu_custom_call.1} parent=0
    #allocation6 [shape = 'u8[262144]{0}', space=vmem, size = 0x40000, scoped, tag = 'input window, operand 0']
    #allocation7 [shape = 's32[2]{0}', space=sflag, size = 0x8, scoped, tag = 'scoped memory for tpu_custom_call.1']
    #allocation8 [shape = 's32[2]{0}', space=sflag, size = 0x8, scoped, tag = 'scoped memory for tpu_custom_call.1']
    #allocation9 [shape = 'u8[131072]{0}', space=vmem, size = 0x20000, scoped, tag = 'input window, operand 1']
    #allocation10 [shape = 's32[2]{0}', space=sflag, size = 0x8, scoped, tag = 'scoped memory for tpu_custom_call.1']
    #allocation11 [shape = 'u8[65536]{0}', space=vmem, size = 0x10000, scoped, tag = 'input window, operand 2, single buffered']
    #allocation12 [shape = 'u8[512]{0}', space=vmem, size = 0x400, scoped, tag = 'input window, operand 3, single buffered']
    #allocation13 [shape = 's32[1]{0}', space=sflag, size = 0x4, scoped, tag = 'scoped memory for tpu_custom_call.1']
    #allocation14 [shape = 'u8[65536]{0}', space=vmem, size = 0x10000, scoped, tag = 'input window, operand 4, single buffered']
    #allocation15 [shape = 'u8[512]{0}', space=vmem, size = 0x400, scoped, tag = 'input window, operand 5, single buffered']
    #allocation16 [shape = 's32[1]{0}', space=sflag, size = 0x4, scoped, tag = 'scoped memory for tpu_custom_call.1']
    #allocation17 [shape = 'u8[8192]{0}', space=vmem, size = 0x2000, scoped, tag = 'input window, operand 6']
    #allocation18 [shape = 'u8[65536]{0}', space=vmem, size = 0x10000, scoped, tag = 'input window, operand 7, single buffered']
    #allocation19 [shape = 'u8[512]{0}', space=vmem, size = 0x400, scoped, tag = 'input window, operand 8, single buffered']
    #allocation20 [shape = 'u8[4096]{0}', space=vmem, size = 0x1000, scoped, tag = 'output window, operand 0, single buffered']
    %14 = vsyncpa [#allocation7], 0
    %s15 = scalar_lea.sflag [#allocation7], 1
    %16 = vsyncpa %s15, 0
    %17 = vsyncpa [#allocation10], 0
    %s18 = scalar_lea.sflag [#allocation10], 1
    %19 = vsyncpa %s18, 0
    %20 = vsyncpa [#allocation13], 0
    %21 = vsyncpa [#allocation16], 0
    %22 = vsyncpa [#allocation8], 0
    loop: start=0, step=1, limit=20
    $region2: #{tpu_custom_call.1} parent=1 // loop_pre_header
      _
    $region3: #{tpu_custom_call.1} parent=1 // loop_header
      %s24 = sphi 0, %s28
      %p25 = scmp.ge.s32.totalorder %s24, 20
      %s31 = sphi 0, %s50
      %s32 = sphi 0, %s46
      %s33 = sphi 0, %s42
      %s34 = sphi 0, %s31
      %s35 = sphi 0, %s32
      %s36 = sphi 0, %s33
      %s37 = sphi 0, %s34
      %s38 = sphi 0, %s35
      %s39 = sphi 0, %s36
      %s55 = sphi 0, %s57
      %s58 = sphi 0, %s55
      %s59 = sphi 0, %s58
      %s75 = sphi 0, %s59
      %s91 = sphi 0, %s93
      %s94 = sphi 0, %s91
      %s95 = sphi 0, %s94
      %s111 = sphi 0, %s95
      %s115 = sphi 0, %s115
      %s117 = sphi 0, %s115
      %s118 = sphi 0, %s117
      %s132 = sphi 0, %s118
      %s136 = sphi 0, %s136
      %s138 = sphi 0, %s136
      %s139 = sphi 0, %s138
      %s153 = sphi 0, %s139
      %s157 = sphi 0, %s157
      %s159 = sphi 0, %s157
      %s160 = sphi 0, %s159
      %s174 = sphi 0, %s160
      %s178 = sphi 0, %s178
      %s180 = sphi 0, %s178
      %s181 = sphi 0, %s180
      %s195 = sphi 0, %s181
      %s201 = sphi 0, %s203
      %s204 = sphi 0, %s201
      %s205 = sphi 0, %s204
      %s221 = sphi 0, %s205
      %s225 = sphi 0, %s225
      %s227 = sphi 0, %s225
      %s228 = sphi 0, %s227
      %s242 = sphi 0, %s228
      %s246 = sphi 0, %s246
      %s248 = sphi 0, %s246
      %s249 = sphi 0, %s248
      %s263 = sphi 0, %s249
      %s267 = sphi 0, %s267
      %s269 = sphi 0, %s267
      %s270 = sphi 0, %s269
      %s284 = sphi 0, %s270
    $region4: #{tpu_custom_call.1} parent=1 // loop_header_branch
      %27 = sbr.rel (%p25) target = $region8
    $region5: #{tpu_custom_call.1} parent=1 // loop_body
      %s29 = ssub.s32 %s24, 1
      %s30 = ssub.s32 %s24, 2
      %s40 = sadd.s32 1, %s33
      %p41 = scmp.ge.s32.totalorder %s40, 3
      %s42 = scalar_select %p41, 0, %s40
      %s43 = sadd.s32 1, %s32
      %s44 = scalar_select %p41, %s43, %s32
      %p45 = scmp.ge.s32.totalorder %s44, 3
      %s46 = scalar_select %p45, 0, %s44
      %s47 = sadd.s32 1, %s31
      %s48 = scalar_select %p45, %s47, %s31
      %p49 = scmp.ge.s32.totalorder %s48, 2
      %s50 = scalar_select %p49, 0, %s48
      %s51 = ssub.s32 %s32, %s46
      %s52 = ssub.s32 %s33, %s42
      %s53 = sor.u32 %s51, %s52
      %p54 = scmp.eq.s32.totalorder %s53, 0
      %s56 = sadd.s32 %s55, 1
      %s57 = scalar_select %p54, %s55, %s56
      %p60 = pneg %p54
      %p61 = scmp.eq.s32.totalorder %s24, 17
      %p62 = por %p60, %p61
      %p63 = scmp.ne.s32.totalorder %s55, %s58
      %p64 = scmp.eq.s32.totalorder %s24, 0
      %p65 = por %p63, %p64
      %p66 = scmp.ne.s32.totalorder %s55, %s58
      %p67 = scmp.eq.s32.totalorder %s29, 17
      %p68 = por %p66, %p67
      %p69 = scmp.ne.s32.totalorder %s58, %s59
      %p70 = scmp.eq.s32.totalorder %s29, 0
      %p71 = por %p69, %p70
      %p72 = scmp.ne.s32.totalorder %s58, %s59
      %p73 = scmp.eq.s32.totalorder %s30, 17
      %p74 = por %p72, %p73
      %p76 = scmp.ne.s32.totalorder %s59, %s75
      %p77 = scmp.eq.s32.totalorder %s30, 0
      %p78 = por %p76, %p77
      %p79 = scmp.eq.s32.totalorder %s31, 0
      %p80 = scmp.eq.s32.totalorder %s32, 0
      %p81 = pnand %p79, %p80
      %p82 = pneg %p81
      %s83 = scalar_select %p82, %s33, 0
      %p84 = scmp.eq.s32.totalorder %s50, 0
      %p85 = scmp.eq.s32.totalorder %s46, 0
      %p86 = pnand %p84, %p85
      %p87 = pneg %p86
      %s88 = scalar_select %p87, %s42, 0
      %s89 = ssub.s32 %s83, %s88
      %p90 = scmp.eq.s32.totalorder %s89, 0
      %s92 = sadd.s32 %s91, 1
      %s93 = scalar_select %p90, %s91, %s92
      %p96 = pneg %p90
      %p97 = scmp.eq.s32.totalorder %s24, 17
      %p98 = por %p96, %p97
      %p99 = scmp.ne.s32.totalorder %s91, %s94
      %p100 = scmp.eq.s32.totalorder %s24, 0
      %p101 = por %p99, %p100
      %p102 = scmp.ne.s32.totalorder %s91, %s94
      %p103 = scmp.eq.s32.totalorder %s29, 17
      %p104 = por %p102, %p103
      %p105 = scmp.ne.s32.totalorder %s94, %s95
      %p106 = scmp.eq.s32.totalorder %s29, 0
      %p107 = por %p105, %p106
      %p108 = scmp.ne.s32.totalorder %s94, %s95
      %p109 = scmp.eq.s32.totalorder %s30, 17
      %p110 = por %p108, %p109
      %p112 = scmp.ne.s32.totalorder %s95, %s111
      %p113 = scmp.eq.s32.totalorder %s30, 0
      %p114 = por %p112, %p113
      %s116 = sadd.s32 %s115, 1
      %p119 = scmp.eq.s32.totalorder %s24, 17
      %p120 = scmp.ne.s32.totalorder %s115, %s117
      %p121 = scmp.eq.s32.totalorder %s24, 0
      %p122 = por %p120, %p121
      %p123 = scmp.ne.s32.totalorder %s115, %s117
      %p124 = scmp.eq.s32.totalorder %s29, 17
      %p125 = por %p123, %p124
      %p126 = scmp.ne.s32.totalorder %s117, %s118
      %p127 = scmp.eq.s32.totalorder %s29, 0
      %p128 = por %p126, %p127
      %p129 = scmp.ne.s32.totalorder %s117, %s118
      %p130 = scmp.eq.s32.totalorder %s30, 17
      %p131 = por %p129, %p130
      %p133 = scmp.ne.s32.totalorder %s118, %s132
      %p134 = scmp.eq.s32.totalorder %s30, 0
      %p135 = por %p133, %p134
      %s137 = sadd.s32 %s136, 1
      %p140 = scmp.eq.s32.totalorder %s24, 17
      %p141 = scmp.ne.s32.totalorder %s136, %s138
      %p142 = scmp.eq.s32.totalorder %s24, 0
      %p143 = por %p141, %p142
      %p144 = scmp.ne.s32.totalorder %s136, %s138
      %p145 = scmp.eq.s32.totalorder %s29, 17
      %p146 = por %p144, %p145
      %p147 = scmp.ne.s32.totalorder %s138, %s139
      %p148 = scmp.eq.s32.totalorder %s29, 0
      %p149 = por %p147, %p148
      %p150 = scmp.ne.s32.totalorder %s138, %s139
      %p151 = scmp.eq.s32.totalorder %s30, 17
      %p152 = por %p150, %p151
      %p154 = scmp.ne.s32.totalorder %s139, %s153
      %p155 = scmp.eq.s32.totalorder %s30, 0
      %p156 = por %p154, %p155
      %s158 = sadd.s32 %s157, 1
      %p161 = scmp.eq.s32.totalorder %s24, 17
      %p162 = scmp.ne.s32.totalorder %s157, %s159
      %p163 = scmp.eq.s32.totalorder %s24, 0
      %p164 = por %p162, %p163
      %p165 = scmp.ne.s32.totalorder %s157, %s159
      %p166 = scmp.eq.s32.totalorder %s29, 17
      %p167 = por %p165, %p166
      %p168 = scmp.ne.s32.totalorder %s159, %s160
      %p169 = scmp.eq.s32.totalorder %s29, 0
      %p170 = por %p168, %p169
      %p171 = scmp.ne.s32.totalorder %s159, %s160
      %p172 = scmp.eq.s32.totalorder %s30, 17
      %p173 = por %p171, %p172
      %p175 = scmp.ne.s32.totalorder %s160, %s174
      %p176 = scmp.eq.s32.totalorder %s30, 0
      %p177 = por %p175, %p176
      %s179 = sadd.s32 %s178, 1
      %p182 = scmp.eq.s32.totalorder %s24, 17
      %p183 = scmp.ne.s32.totalorder %s178, %s180
      %p184 = scmp.eq.s32.totalorder %s24, 0
      %p185 = por %p183, %p184
      %p186 = scmp.ne.s32.totalorder %s178, %s180
      %p187 = scmp.eq.s32.totalorder %s29, 17
      %p188 = por %p186, %p187
      %p189 = scmp.ne.s32.totalorder %s180, %s181
      %p190 = scmp.eq.s32.totalorder %s29, 0
      %p191 = por %p189, %p190
      %p192 = scmp.ne.s32.totalorder %s180, %s181
      %p193 = scmp.eq.s32.totalorder %s30, 17
      %p194 = por %p192, %p193
      %p196 = scmp.ne.s32.totalorder %s181, %s195
      %p197 = scmp.eq.s32.totalorder %s30, 0
      %p198 = por %p196, %p197
      %s199 = ssub.s32 %s32, %s46
      %p200 = scmp.eq.s32.totalorder %s199, 0
      %s202 = sadd.s32 %s201, 1
      %s203 = scalar_select %p200, %s201, %s202
      %p206 = pneg %p200
      %p207 = scmp.eq.s32.totalorder %s24, 17
      %p208 = por %p206, %p207
      %p209 = scmp.ne.s32.totalorder %s201, %s204
      %p210 = scmp.eq.s32.totalorder %s24, 0
      %p211 = por %p209, %p210
      %p212 = scmp.ne.s32.totalorder %s201, %s204
      %p213 = scmp.eq.s32.totalorder %s29, 17
      %p214 = por %p212, %p213
      %p215 = scmp.ne.s32.totalorder %s204, %s205
      %p216 = scmp.eq.s32.totalorder %s29, 0
      %p217 = por %p215, %p216
      %p218 = scmp.ne.s32.totalorder %s204, %s205
      %p219 = scmp.eq.s32.totalorder %s30, 17
      %p220 = por %p218, %p219
      %p222 = scmp.ne.s32.totalorder %s205, %s221
      %p223 = scmp.eq.s32.totalorder %s30, 0
      %p224 = por %p222, %p223
      %s226 = sadd.s32 %s225, 1
      %p229 = scmp.eq.s32.totalorder %s24, 17
      %p230 = scmp.ne.s32.totalorder %s225, %s227
      %p231 = scmp.eq.s32.totalorder %s24, 0
      %p232 = por %p230, %p231
      %p233 = scmp.ne.s32.totalorder %s225, %s227
      %p234 = scmp.eq.s32.totalorder %s29, 17
      %p235 = por %p233, %p234
      %p236 = scmp.ne.s32.totalorder %s227, %s228
      %p237 = scmp.eq.s32.totalorder %s29, 0
      %p238 = por %p236, %p237
      %p239 = scmp.ne.s32.totalorder %s227, %s228
      %p240 = scmp.eq.s32.totalorder %s30, 17
      %p241 = por %p239, %p240
      %p243 = scmp.ne.s32.totalorder %s228, %s242
      %p244 = scmp.eq.s32.totalorder %s30, 0
      %p245 = por %p243, %p244
      %s247 = sadd.s32 %s246, 1
      %p250 = scmp.eq.s32.totalorder %s24, 17
      %p251 = scmp.ne.s32.totalorder %s246, %s248
      %p252 = scmp.eq.s32.totalorder %s24, 0
      %p253 = por %p251, %p252
      %p254 = scmp.ne.s32.totalorder %s246, %s248
      %p255 = scmp.eq.s32.totalorder %s29, 17
      %p256 = por %p254, %p255
      %p257 = scmp.ne.s32.totalorder %s248, %s249
      %p258 = scmp.eq.s32.totalorder %s29, 0
      %p259 = por %p257, %p258
      %p260 = scmp.ne.s32.totalorder %s248, %s249
      %p261 = scmp.eq.s32.totalorder %s30, 17
      %p262 = por %p260, %p261
      %p264 = scmp.ne.s32.totalorder %s249, %s263
      %p265 = scmp.eq.s32.totalorder %s30, 0
      %p266 = por %p264, %p265
      %s268 = sadd.s32 %s267, 1
      %p271 = scmp.eq.s32.totalorder %s24, 17
      %p272 = scmp.ne.s32.totalorder %s267, %s269
      %p273 = scmp.eq.s32.totalorder %s24, 0
      %p274 = por %p272, %p273
      %p275 = scmp.ne.s32.totalorder %s267, %s269
      %p276 = scmp.eq.s32.totalorder %s29, 17
      %p277 = por %p275, %p276
      %p278 = scmp.ne.s32.totalorder %s269, %s270
      %p279 = scmp.eq.s32.totalorder %s29, 0
      %p280 = por %p278, %p279
      %p281 = scmp.ne.s32.totalorder %s269, %s270
      %p282 = scmp.eq.s32.totalorder %s30, 17
      %p283 = por %p281, %p282
      %p285 = scmp.ne.s32.totalorder %s270, %s284
      %p286 = scmp.eq.s32.totalorder %s30, 0
      %p287 = por %p285, %p286
      %p288 = scmp.le.s32.totalorder 1, %s24
      %p289 = scmp.lt.s32.totalorder %s24, 19
      %p290 = pnand %p288, %p289
      %p291 = pneg %p290
      // Predicated region
      $region9: #{tpu_custom_call.1} parent=5 // pred_check
        _
      $region10: #{tpu_custom_call.1} parent=5 // pred_check_branch
        %293 = sbr.rel (%p290) target = $region12
      $region11: #{tpu_custom_call.1} parent=5 // pred_region
        %s294 = ssub.s32 %s24, 1
        // Predicated region
        $region13: #{tpu_custom_call.1} parent=11 // pred_check
          %p295 = pneg %p128
        $region14: #{tpu_custom_call.1} parent=11 // pred_check_branch
          %297 = sbr.rel (%p295) target = $region16
        $region15: #{tpu_custom_call.1} parent=11 // pred_region
          %299 = vsyncadd [#allocation10], 0
          %s300 = sshll.u32 %s2, 4
          %s301 = int_to_ptr.hbm [resolvable:$true] %s300
          %s302 = sshll.u32 [#allocation11], 4
          %s303 = int_to_ptr.vmem [resolvable:$true] %s302
          %308 = dma.hbm_to_vmem [thread:$0]  %s301, 2048, %s303, [#allocation10], 128, 128, 8
        $region16: #{tpu_custom_call.1} parent=11 // pred_fallthru
          _
        // Predicated region
        $region17: #{tpu_custom_call.1} parent=11 // pred_check
          %p309 = pneg %p149
        $region18: #{tpu_custom_call.1} parent=11 // pred_check_branch
          %311 = sbr.rel (%p309) target = $region20
        $region19: #{tpu_custom_call.1} parent=11 // pred_region
          %313 = vsyncadd [#allocation13], 0
          %s315 = sshll.u32 %s3, 4
          %s316 = int_to_ptr.hbm [resolvable:$true] %s315
          %s317 = sshll.u32 [#allocation12], 4
          %s318 = int_to_ptr.vmem [resolvable:$true] %s317
          %320 = dma.hbm_to_vmem [thread:$0]  %s316, 16, %s318, [#allocation13]
        $region20: #{tpu_custom_call.1} parent=11 // pred_fallthru
          _
        // Predicated region
        $region21: #{tpu_custom_call.1} parent=11 // pred_check
          %p321 = pneg %p170
        $region22: #{tpu_custom_call.1} parent=11 // pred_check_branch
          %323 = sbr.rel (%p321) target = $region24
        $region23: #{tpu_custom_call.1} parent=11 // pred_region
          %325 = vsyncadd [#allocation13], 0
          %s326 = sshll.u32 %s4, 4
          %s327 = int_to_ptr.hbm [resolvable:$true] %s326
          %s328 = sshll.u32 [#allocation14], 4
          %s329 = int_to_ptr.vmem [resolvable:$true] %s328
          %334 = dma.hbm_to_vmem [thread:$0]  %s327, 2048, %s329, [#allocation13], 128, 128, 8
        $region24: #{tpu_custom_call.1} parent=11 // pred_fallthru
          _
        // Predicated region
        $region25: #{tpu_custom_call.1} parent=11 // pred_check
          %p335 = pneg %p191
        $region26: #{tpu_custom_call.1} parent=11 // pred_check_branch
          %337 = sbr.rel (%p335) target = $region28
        $region27: #{tpu_custom_call.1} parent=11 // pred_region
          %339 = vsyncadd [#allocation16], 0
          %s341 = sshll.u32 %s5, 4
          %s342 = int_to_ptr.hbm [resolvable:$true] %s341
          %s343 = sshll.u32 [#allocation15], 4
          %s344 = int_to_ptr.vmem [resolvable:$true] %s343
          %346 = dma.hbm_to_vmem [thread:$0]  %s342, 16, %s344, [#allocation16]
        $region28: #{tpu_custom_call.1} parent=11 // pred_fallthru
          _
        // Predicated region
        $region29: #{tpu_custom_call.1} parent=11 // pred_check
          %p347 = pneg %p238
        $region30: #{tpu_custom_call.1} parent=11 // pred_check_branch
          %349 = sbr.rel (%p347) target = $region32
        $region31: #{tpu_custom_call.1} parent=11 // pred_region
          %351 = vsyncadd [#allocation10], 0
          %s352 = sshll.u32 %s7, 4
          %s353 = int_to_ptr.hbm [resolvable:$true] %s352
          %s354 = sshll.u32 [#allocation18], 4
          %s355 = int_to_ptr.vmem [resolvable:$true] %s354
          %360 = dma.hbm_to_vmem [thread:$0]  %s353, 2048, %s355, [#allocation10], 128, 128, 8
        $region32: #{tpu_custom_call.1} parent=11 // pred_fallthru
          _
        // Predicated region
        $region33: #{tpu_custom_call.1} parent=11 // pred_check
          %p361 = pneg %p259
        $region34: #{tpu_custom_call.1} parent=11 // pred_check_branch
          %363 = sbr.rel (%p361) target = $region36
        $region35: #{tpu_custom_call.1} parent=11 // pred_region
          %365 = vsyncadd [#allocation13], 0
          %s367 = sshll.u32 %s8, 4
          %s368 = int_to_ptr.hbm [resolvable:$true] %s367
          %s369 = sshll.u32 [#allocation19], 4
          %s370 = int_to_ptr.vmem [resolvable:$true] %s369
          %372 = dma.hbm_to_vmem [thread:$0]  %s368, 16, %s370, [#allocation13]
        $region36: #{tpu_custom_call.1} parent=11 // pred_fallthru
          _
      $region12: #{tpu_custom_call.1} parent=5 // pred_fallthru
        _
      %p373 = scmp.lt.s32.totalorder %s24, 18
      // Predicated region
      $region37: #{tpu_custom_call.1} parent=5 // pred_check
        %p374 = pneg %p373
      $region38: #{tpu_custom_call.1} parent=5 // pred_check_branch
        %376 = sbr.rel (%p374) target = $region40
      $region39: #{tpu_custom_call.1} parent=5 // pred_region
        // Predicated region
        $region41: #{tpu_custom_call.1} parent=39 // pred_check
          %p377 = pneg %p65
        $region42: #{tpu_custom_call.1} parent=39 // pred_check_branch
          %379 = sbr.rel (%p377) target = $region44
        $region43: #{tpu_custom_call.1} parent=39 // pred_region
          %s380 = sand.u32 %s24, 1
          %s381 = scalar_lea.sflag [#allocation7], %s380
          %s382 = sand.u32 %s55, 1
          %s383 = smul.addr %s382, 256
          %s384 = scalar_lea.vmem [#allocation6], %s383
          %s385 = smul.u32 32, %s32
          %s386 = smul.u32 2, %s33
          %388 = vsyncadd %s381, 0
          %s389 = smul.addr %s385, 6
          %s390 = sadd.s32 %s386, %s389
          %s391 = smul.addr %s390, 4
          %s392 = scalar_lea.hbm %s0, %s391
          %s393 = sshll.u32 %s392, 4
          %s394 = int_to_ptr.hbm [resolvable:$true] %s393
          %s395 = sshll.u32 %s384, 4
          %s396 = int_to_ptr.vmem [resolvable:$true] %s395
          %401 = dma.hbm_to_vmem [thread:$0]  %s394, 4096, %s396, %s381, 384, 128, 8
        $region44: #{tpu_custom_call.1} parent=39 // pred_fallthru
          _
        // Predicated region
        $region45: #{tpu_custom_call.1} parent=39 // pred_check
          %p402 = pneg %p101
        $region46: #{tpu_custom_call.1} parent=39 // pred_check_branch
          %404 = sbr.rel (%p402) target = $region48
        $region47: #{tpu_custom_call.1} parent=39 // pred_region
          %s405 = sand.u32 %s24, 1
          %s406 = scalar_lea.sflag [#allocation10], %s405
          %s407 = sand.u32 %s91, 1
          %s408 = smul.addr %s407, 128
          %s409 = scalar_lea.vmem [#allocation9], %s408
          %p410 = scmp.eq.s32.totalorder %s31, 0
          %p411 = scmp.eq.s32.totalorder %s32, 0
          %p412 = pnand %p410, %p411
          %p413 = pneg %p412
          %s414 = scalar_select %p413, %s33, 0
          %s415 = smul.u32 32, %s414
          %417 = vsyncadd %s406, 0
          %s418 = smul.addr %s415, 4
          %s419 = scalar_lea.hbm %s1, %s418
          %s420 = sshll.u32 %s419, 4
          %s421 = int_to_ptr.hbm [resolvable:$true] %s420
          %s422 = sshll.u32 %s409, 4
          %s423 = int_to_ptr.vmem [resolvable:$true] %s422
          %428 = dma.hbm_to_vmem [thread:$0]  %s421, 2048, %s423, %s406, 64, 64, 4
        $region48: #{tpu_custom_call.1} parent=39 // pred_fallthru
          _
        // Predicated region
        $region49: #{tpu_custom_call.1} parent=39 // pred_check
          %p429 = pneg %p211
        $region50: #{tpu_custom_call.1} parent=39 // pred_check_branch
          %431 = sbr.rel (%p429) target = $region52
        $region51: #{tpu_custom_call.1} parent=39 // pred_region
          %s432 = sand.u32 %s24, 1
          %s433 = scalar_lea.sflag [#allocation7], %s432
          %s434 = sand.u32 %s201, 1
          %s435 = smul.addr %s434, 8
          %s436 = scalar_lea.vmem [#allocation17], %s435
          %s437 = smul.u32 2, %s32
          %439 = vsyncadd %s433, 0
          %s440 = smul.addr %s437, 4
          %s441 = scalar_lea.hbm %s6, %s440
          %s443 = sshll.u32 %s441, 4
          %s444 = int_to_ptr.hbm [resolvable:$true] %s443
          %s445 = sshll.u32 %s436, 4
          %s446 = int_to_ptr.vmem [resolvable:$true] %s445
          %448 = dma.hbm_to_vmem [thread:$0]  %s444, 128, %s446, %s433
        $region52: #{tpu_custom_call.1} parent=39 // pred_fallthru
          _
      $region40: #{tpu_custom_call.1} parent=5 // pred_fallthru
        _
      %p449 = scmp.le.s32.totalorder 1, %s24
      %p450 = scmp.lt.s32.totalorder %s24, 19
      %p451 = pnand %p449, %p450
      %p452 = pneg %p451
      // Predicated region
      $region53: #{tpu_custom_call.1} parent=5 // pred_check
        _
      $region54: #{tpu_custom_call.1} parent=5 // pred_check_branch
        %454 = sbr.rel (%p451) target = $region56
      $region55: #{tpu_custom_call.1} parent=5 // pred_region
        %s455 = ssub.s32 %s24, 1
        %s456 = sand.u32 %s29, 1
        %s457 = scalar_lea.sflag [#allocation7], %s456
        %s458 = sand.u32 %s58, 1
        %s459 = smul.addr %s458, 256
        %s460 = scalar_lea.vmem [#allocation6], %s459
        // Predicated region
        $region57: #{tpu_custom_call.1} parent=55 // pred_check
          %p461 = pneg %p71
        $region58: #{tpu_custom_call.1} parent=55 // pred_check_branch
          %463 = sbr.rel (%p461) target = $region60
        $region59: #{tpu_custom_call.1} parent=55 // pred_region
          %465 = dma.done %s457, 4096
        $region60: #{tpu_custom_call.1} parent=55 // pred_fallthru
          _
        %s466 = sand.u32 %s29, 1
        %s467 = scalar_lea.sflag [#allocation10], %s466
        %s468 = sand.u32 %s94, 1
        %s469 = smul.addr %s468, 128
        %s470 = scalar_lea.vmem [#allocation9], %s469
        // Predicated region
        $region61: #{tpu_custom_call.1} parent=55 // pred_check
          %p471 = pneg %p107
        $region62: #{tpu_custom_call.1} parent=55 // pred_check_branch
          %473 = sbr.rel (%p471) target = $region64
        $region63: #{tpu_custom_call.1} parent=55 // pred_region
          %475 = dma.done %s467, 2048
        $region64: #{tpu_custom_call.1} parent=55 // pred_fallthru
          _
        // Predicated region
        $region65: #{tpu_custom_call.1} parent=55 // pred_check
          %p476 = pneg %p128
        $region66: #{tpu_custom_call.1} parent=55 // pred_check_branch
          %478 = sbr.rel (%p476) target = $region68
        $region67: #{tpu_custom_call.1} parent=55 // pred_region
          %480 = dma.done [#allocation10], 2048
        $region68: #{tpu_custom_call.1} parent=55 // pred_fallthru
          _
        // Predicated region
        $region69: #{tpu_custom_call.1} parent=55 // pred_check
          %p481 = pneg %p149
        $region70: #{tpu_custom_call.1} parent=55 // pred_check_branch
          %483 = sbr.rel (%p481) target = $region72
        $region71: #{tpu_custom_call.1} parent=55 // pred_region
          %485 = dma.done [#allocation13], 16
        $region72: #{tpu_custom_call.1} parent=55 // pred_fallthru
          _
        // Predicated region
        $region73: #{tpu_custom_call.1} parent=55 // pred_check
          %p486 = pneg %p170
        $region74: #{tpu_custom_call.1} parent=55 // pred_check_branch
          %488 = sbr.rel (%p486) target = $region76
        $region75: #{tpu_custom_call.1} parent=55 // pred_region
          %490 = dma.done [#allocation13], 2048
        $region76: #{tpu_custom_call.1} parent=55 // pred_fallthru
          _
        // Predicated region
        $region77: #{tpu_custom_call.1} parent=55 // pred_check
          %p491 = pneg %p191
        $region78: #{tpu_custom_call.1} parent=55 // pred_check_branch
          %493 = sbr.rel (%p491) target = $region80
        $region79: #{tpu_custom_call.1} parent=55 // pred_region
          %495 = dma.done [#allocation16], 16
        $region80: #{tpu_custom_call.1} parent=55 // pred_fallthru
          _
        %s496 = sand.u32 %s29, 1
        %s497 = scalar_lea.sflag [#allocation7], %s496
        %s498 = sand.u32 %s204, 1
        %s499 = smul.addr %s498, 8
        %s500 = scalar_lea.vmem [#allocation17], %s499
        // Predicated region
        $region81: #{tpu_custom_call.1} parent=55 // pred_check
          %p501 = pneg %p217
        $region82: #{tpu_custom_call.1} parent=55 // pred_check_branch
          %503 = sbr.rel (%p501) target = $region84
        $region83: #{tpu_custom_call.1} parent=55 // pred_region
          %505 = dma.done %s497, 128
        $region84: #{tpu_custom_call.1} parent=55 // pred_fallthru
          _
        // Predicated region
        $region85: #{tpu_custom_call.1} parent=55 // pred_check
          %p506 = pneg %p238
        $region86: #{tpu_custom_call.1} parent=55 // pred_check_branch
          %508 = sbr.rel (%p506) target = $region88
        $region87: #{tpu_custom_call.1} parent=55 // pred_region
          %510 = dma.done [#allocation10], 2048
        $region88: #{tpu_custom_call.1} parent=55 // pred_fallthru
          _
        // Predicated region
        $region89: #{tpu_custom_call.1} parent=55 // pred_check
          %p511 = pneg %p259
        $region90: #{tpu_custom_call.1} parent=55 // pred_check_branch
          %513 = sbr.rel (%p511) target = $region92
        $region91: #{tpu_custom_call.1} parent=55 // pred_region
          %515 = dma.done [#allocation13], 16
        $region92: #{tpu_custom_call.1} parent=55 // pred_fallthru
          _
        %s516 = sand.u32 %s29, 1
        %s517 = scalar_lea.sflag [#allocation7], %s516
        %s518 = sand.u32 %s58, 1
        %s519 = smul.addr %s518, 256
        %s520 = scalar_lea.vmem [#allocation6], %s519
        %p521 = pneg %p71
        %p522 = pneg %p68
        %s523 = sand.u32 %s29, 1
        %s524 = scalar_lea.sflag [#allocation10], %s523
        %s525 = sand.u32 %s94, 1
        %s526 = smul.addr %s525, 128
        %s527 = scalar_lea.vmem [#allocation9], %s526
        %p528 = pneg %p107
        %p529 = pneg %p104
        %p530 = pneg %p128
        %p531 = pneg %p125
        %p532 = pneg %p149
        %p533 = pneg %p146
        %p534 = pneg %p170
        %p535 = pneg %p167
        %p536 = pneg %p191
        %p537 = pneg %p188
        %s538 = sand.u32 %s29, 1
        %s539 = scalar_lea.sflag [#allocation7], %s538
        %s540 = sand.u32 %s204, 1
        %s541 = smul.addr %s540, 8
        %s542 = scalar_lea.vmem [#allocation17], %s541
        %p543 = pneg %p217
        %p544 = pneg %p214
        %p545 = pneg %p238
        %p546 = pneg %p235
        %p547 = pneg %p259
        %p548 = pneg %p256
        %p549 = pneg %p280
        %p550 = pneg %p277
        %s551 = smul.u32 32, %s35
        %s552 = smul.u32 2, %s36
        %p553 = scmp.eq.s32.totalorder %s34, 0
        %p554 = scmp.eq.s32.totalorder %s35, 0
        %p555 = pnand %p553, %p554
        %p556 = pneg %p555
        %s557 = scalar_select %p556, %s36, 0
        %s558 = smul.u32 32, %s557
        %s559 = smul.u32 2, %s35
        %s560 = smul.u32 %s36, 256
        %p561 = scmp.eq.s32.totalorder %s35, 0
        // Predicated region
        $region93: #{tpu_custom_call.1} parent=55 // pred_check
          %p562 = pneg %p561
        $region94: #{tpu_custom_call.1} parent=55 // pred_check_branch
          %564 = sbr.rel (%p562) target = $region96
        $region95: #{tpu_custom_call.1} parent=55 // pred_region
          %p565 = scmp.eq.s32.totalorder %s34, 0
          // Predicated region
          $region97: #{tpu_custom_call.1} parent=95 // pred_check
            %p566 = pneg %p565
          $region98: #{tpu_custom_call.1} parent=95 // pred_check_branch
            %568 = sbr.rel (%p566) target = $region100
          $region99: #{tpu_custom_call.1} parent=95 // pred_region
            %v569 = vld [vmem:[%s470] sm:$0xf]
            %v570 = vld [vmem:[%s470 + $0x4] sm:$0xf]
            %v571 = vld [vmem:[%s470 + $0x8] sm:$0xf]
            %v572 = vld [vmem:[%s470 + $0xc] sm:$0xf]
            %v573 = vld [vmem:[%s470 + $0x10] sm:$0xf]
            %v574 = vld [vmem:[%s470 + $0x14] sm:$0xf]
            %v575 = vld [vmem:[%s470 + $0x18] sm:$0xf]
            %v576 = vld [vmem:[%s470 + $0x1c] sm:$0xf]
            %v577 = vld [vmem:[%s470 + $0x20] sm:$0xf]
            %v578 = vld [vmem:[%s470 + $0x24] sm:$0xf]
            %v579 = vld [vmem:[%s470 + $0x28] sm:$0xf]
            %v580 = vld [vmem:[%s470 + $0x2c] sm:$0xf]
            %v581 = vld [vmem:[%s470 + $0x30] sm:$0xf]
            %v582 = vld [vmem:[%s470 + $0x34] sm:$0xf]
            %v583 = vld [vmem:[%s470 + $0x38] sm:$0xf]
            %v584 = vld [vmem:[%s470 + $0x3c] sm:$0xf]
            %v585 = vld [vmem:[%s470 + $0x40] sm:$0xf]
            %v586 = vld [vmem:[%s470 + $0x44] sm:$0xf]
            %v587 = vld [vmem:[%s470 + $0x48] sm:$0xf]
            %v588 = vld [vmem:[%s470 + $0x4c] sm:$0xf]
            %v589 = vld [vmem:[%s470 + $0x50] sm:$0xf]
            %v590 = vld [vmem:[%s470 + $0x54] sm:$0xf]
            %v591 = vld [vmem:[%s470 + $0x58] sm:$0xf]
            %v592 = vld [vmem:[%s470 + $0x5c] sm:$0xf]
            %v593 = vld [vmem:[%s470 + $0x60] sm:$0xf]
            %v594 = vld [vmem:[%s470 + $0x64] sm:$0xf]
            %v595 = vld [vmem:[%s470 + $0x68] sm:$0xf]
            %v596 = vld [vmem:[%s470 + $0x6c] sm:$0xf]
            %v597 = vld [vmem:[%s470 + $0x70] sm:$0xf]
            %v598 = vld [vmem:[%s470 + $0x74] sm:$0xf]
            %v599 = vld [vmem:[%s470 + $0x78] sm:$0xf]
            %v600 = vld [vmem:[%s470 + $0x7c] sm:$0xf]
            %v601 = vld [vmem:[#allocation11] sm:$0xff]
            %v602 = vld [vmem:[#allocation11 + $0x8] sm:$0xff]
            %v603 = vld [vmem:[#allocation11 + $0x10] sm:$0xff]
            %v604 = vld [vmem:[#allocation11 + $0x18] sm:$0xff]
            %v605 = vld [vmem:[#allocation11 + $0x20] sm:$0xff]
            %v606 = vld [vmem:[#allocation11 + $0x28] sm:$0xff]
            %v607 = vld [vmem:[#allocation11 + $0x30] sm:$0xff]
            %v608 = vld [vmem:[#allocation11 + $0x38] sm:$0xff]
            %v609 = vld [vmem:[#allocation11 + $0x40] sm:$0xff]
            %v610 = vld [vmem:[#allocation11 + $0x48] sm:$0xff]
            %v611 = vld [vmem:[#allocation11 + $0x50] sm:$0xff]
            %v612 = vld [vmem:[#allocation11 + $0x58] sm:$0xff]
            %v613 = vld [vmem:[#allocation11 + $0x60] sm:$0xff]
            %v614 = vld [vmem:[#allocation11 + $0x68] sm:$0xff]
            %v615 = vld [vmem:[#allocation11 + $0x70] sm:$0xff]
            %v616 = vld [vmem:[#allocation11 + $0x78] sm:$0xff]
            %v649 = vunpack.c.l.b16 %v569
            %v650 = vunpack.c.l.b16 %v570
            %v651 = vunpack.c.l.b16 %v571
            %v652 = vunpack.c.l.b16 %v572
            %v653 = vunpack.c.l.b16 %v573
            %v654 = vunpack.c.l.b16 %v574
            %v655 = vunpack.c.l.b16 %v575
            %v656 = vunpack.c.l.b16 %v576
            %v657 = vunpack.c.l.b16 %v577
            %v658 = vunpack.c.l.b16 %v578
            %v659 = vunpack.c.l.b16 %v579
            %v660 = vunpack.c.l.b16 %v580
            %v661 = vunpack.c.l.b16 %v581
            %v662 = vunpack.c.l.b16 %v582
            %v663 = vunpack.c.l.b16 %v583
            %v664 = vunpack.c.l.b16 %v584
            %v665 = vunpack.c.l.b16 %v585
            %v666 = vunpack.c.l.b16 %v586
            %v667 = vunpack.c.l.b16 %v587
            %v668 = vunpack.c.l.b16 %v588
            %v669 = vunpack.c.l.b16 %v589
            %v670 = vunpack.c.l.b16 %v590
            %v671 = vunpack.c.l.b16 %v591
            %v672 = vunpack.c.l.b16 %v592
            %v673 = vunpack.c.l.b16 %v593
            %v674 = vunpack.c.l.b16 %v594
            %v675 = vunpack.c.l.b16 %v595
            %v676 = vunpack.c.l.b16 %v596
            %v677 = vunpack.c.l.b16 %v597
            %v678 = vunpack.c.l.b16 %v598
            %v679 = vunpack.c.l.b16 %v599
            %v680 = vunpack.c.l.b16 %v600
            %v681 = vpack.c.b16 %v650, %v649
            %v682 = vpack.c.b16 %v652, %v651
            %v683 = vpack.c.b16 %v654, %v653
            %v684 = vpack.c.b16 %v656, %v655
            %v685 = vpack.c.b16 %v658, %v657
            %v686 = vpack.c.b16 %v660, %v659
            %v687 = vpack.c.b16 %v662, %v661
            %v688 = vpack.c.b16 %v664, %v663
            %v689 = vpack.c.b16 %v666, %v665
            %v690 = vpack.c.b16 %v668, %v667
            %v691 = vpack.c.b16 %v670, %v669
            %v692 = vpack.c.b16 %v672, %v671
            %v693 = vpack.c.b16 %v674, %v673
            %v694 = vpack.c.b16 %v676, %v675
            %v695 = vpack.c.b16 %v678, %v677
            %v696 = vpack.c.b16 %v680, %v679
            %713 = vmatpush.msra.mxu0 %v616
            %714 = vmatpush.msra.mxu0 %v615
            %715 = vmatpush.msra.mxu0 %v614
            %716 = vmatpush.msra.mxu0 %v613
            %717 = vmatpush.msra.mxu0 %v612
            %718 = vmatpush.msra.mxu0 %v611
            %719 = vmatpush.msra.mxu0 %v610
            %720 = vmatpush.msra.mxu0 %v609
            %721 = vmatpush.msra.mxu0 %v608
            %722 = vmatpush.msra.mxu0 %v607
            %723 = vmatpush.msra.mxu0 %v606
            %724 = vmatpush.msra.mxu0 %v605
            %725 = vmatpush.msra.mxu0 %v604
            %726 = vmatpush.msra.mxu0 %v603
            %727 = vmatpush.msra.mxu0 %v602
            %728 = vmatpush.msra.mxu0 %v601
            %729 = vmatmul.bf16.gmra.mxu0 %v681
            %v730 = vpop.f32.mrf.mxu0
            %v731 = vadd.f32 0.0, %v730
            %v732 = vpop.f32.mrf.mxu0
            %v733 = vadd.f32 0.0, %v732
            %734 = vmatmul.bf16.gmra.mxu0 %v682
            %v735 = vpop.f32.mrf.mxu0
            %v736 = vadd.f32 0.0, %v735
            %v737 = vpop.f32.mrf.mxu0
            %v738 = vadd.f32 0.0, %v737
            %739 = vmatmul.bf16.gmra.mxu0 %v683
            %v740 = vpop.f32.mrf.mxu0
            %v741 = vadd.f32 0.0, %v740
            %v742 = vpop.f32.mrf.mxu0
            %v743 = vadd.f32 0.0, %v742
            %744 = vmatmul.bf16.gmra.mxu0 %v684
            %v745 = vpop.f32.mrf.mxu0
            %v746 = vadd.f32 0.0, %v745
            %v747 = vpop.f32.mrf.mxu0
            %v748 = vadd.f32 0.0, %v747
            %749 = vmatmul.bf16.gmra.mxu0 %v685
            %v750 = vpop.f32.mrf.mxu0
            %v751 = vadd.f32 0.0, %v750
            %v752 = vpop.f32.mrf.mxu0
            %v753 = vadd.f32 0.0, %v752
            %754 = vmatmul.bf16.gmra.mxu0 %v686
            %v755 = vpop.f32.mrf.mxu0
            %v756 = vadd.f32 0.0, %v755
            %v757 = vpop.f32.mrf.mxu0
            %v758 = vadd.f32 0.0, %v757
            %759 = vmatmul.bf16.gmra.mxu0 %v687
            %v760 = vpop.f32.mrf.mxu0
            %v761 = vadd.f32 0.0, %v760
            %v762 = vpop.f32.mrf.mxu0
            %v763 = vadd.f32 0.0, %v762
            %764 = vmatmul.bf16.gmra.mxu0 %v688
            %v765 = vpop.f32.mrf.mxu0
            %v766 = vadd.f32 0.0, %v765
            %v767 = vpop.f32.mrf.mxu0
            %v768 = vadd.f32 0.0, %v767
            %769 = vmatmul.bf16.gmra.mxu0 %v689
            %v770 = vpop.f32.mrf.mxu0
            %v771 = vadd.f32 0.0, %v770
            %v772 = vpop.f32.mrf.mxu0
            %v773 = vadd.f32 0.0, %v772
            %774 = vmatmul.bf16.gmra.mxu0 %v690
            %v775 = vpop.f32.mrf.mxu0
            %v776 = vadd.f32 0.0, %v775
            %v777 = vpop.f32.mrf.mxu0
            %v778 = vadd.f32 0.0, %v777
            %779 = vmatmul.bf16.gmra.mxu0 %v691
            %v780 = vpop.f32.mrf.mxu0
            %v781 = vadd.f32 0.0, %v780
            %v782 = vpop.f32.mrf.mxu0
            %v783 = vadd.f32 0.0, %v782
            %784 = vmatmul.bf16.gmra.mxu0 %v692
            %v785 = vpop.f32.mrf.mxu0
            %v786 = vadd.f32 0.0, %v785
            %v787 = vpop.f32.mrf.mxu0
            %v788 = vadd.f32 0.0, %v787
            %789 = vmatmul.bf16.gmra.mxu0 %v693
            %v790 = vpop.f32.mrf.mxu0
            %v791 = vadd.f32 0.0, %v790
            %v792 = vpop.f32.mrf.mxu0
            %v793 = vadd.f32 0.0, %v792
            %794 = vmatmul.bf16.gmra.mxu0 %v694
            %v795 = vpop.f32.mrf.mxu0
            %v796 = vadd.f32 0.0, %v795
            %v797 = vpop.f32.mrf.mxu0
            %v798 = vadd.f32 0.0, %v797
            %799 = vmatmul.bf16.gmra.mxu0 %v695
            %v800 = vpop.f32.mrf.mxu0
            %v801 = vadd.f32 0.0, %v800
            %v802 = vpop.f32.mrf.mxu0
            %v803 = vadd.f32 0.0, %v802
            %804 = vmatmul.bf16.gmra.mxu0 %v696
            %v805 = vpop.f32.mrf.mxu0
            %v806 = vadd.f32 0.0, %v805
            %v807 = vpop.f32.mrf.mxu0
            %v808 = vadd.f32 0.0, %v807
            %809 = vdwg.mxu0
            %v810 = vpack.c.bf16 %v731, %v731
            %v811 = vpack.c.bf16 %v733, %v733
            %v812 = vpack.c.bf16 %v736, %v736
            %v813 = vpack.c.bf16 %v738, %v738
            %v814 = vpack.c.bf16 %v741, %v741
            %v815 = vpack.c.bf16 %v743, %v743
            %v816 = vpack.c.bf16 %v746, %v746
            %v817 = vpack.c.bf16 %v748, %v748
            %v818 = vpack.c.bf16 %v751, %v751
            %v819 = vpack.c.bf16 %v753, %v753
            %v820 = vpack.c.bf16 %v756, %v756
            %v821 = vpack.c.bf16 %v758, %v758
            %v822 = vpack.c.bf16 %v761, %v761
            %v823 = vpack.c.bf16 %v763, %v763
            %v824 = vpack.c.bf16 %v766, %v766
            %v825 = vpack.c.bf16 %v768, %v768
            %v826 = vpack.c.bf16 %v771, %v771
            %v827 = vpack.c.bf16 %v773, %v773
            %v828 = vpack.c.bf16 %v776, %v776
            %v829 = vpack.c.bf16 %v778, %v778
            %v830 = vpack.c.bf16 %v781, %v781
            %v831 = vpack.c.bf16 %v783, %v783
            %v832 = vpack.c.bf16 %v786, %v786
            %v833 = vpack.c.bf16 %v788, %v788
            %v834 = vpack.c.bf16 %v791, %v791
            %v835 = vpack.c.bf16 %v793, %v793
            %v836 = vpack.c.bf16 %v796, %v796
            %v837 = vpack.c.bf16 %v798, %v798
            %v838 = vpack.c.bf16 %v801, %v801
            %v839 = vpack.c.bf16 %v803, %v803
            %v840 = vpack.c.bf16 %v806, %v806
            %v841 = vpack.c.bf16 %v808, %v808
            %s842 = sshra.s32 %s560, 3
            %s843 = sand.u32 %s560, 7
            %s844 = smul.addr %s842, 4
            %s845 = scalar_lea.vmem [#allocation2], %s844
            %846 = vst [vmem:[%s845] sm:$0xf] %v810
            %847 = vst [vmem:[%s845 + $0x4] sm:$0xf] %v811
            %848 = vst [vmem:[%s845 + $0x8] sm:$0xf] %v812
            %849 = vst [vmem:[%s845 + $0xc] sm:$0xf] %v813
            %850 = vst [vmem:[%s845 + $0x10] sm:$0xf] %v814
            %851 = vst [vmem:[%s845 + $0x14] sm:$0xf] %v815
            %852 = vst [vmem:[%s845 + $0x18] sm:$0xf] %v816
            %853 = vst [vmem:[%s845 + $0x1c] sm:$0xf] %v817
            %854 = vst [vmem:[%s845 + $0x20] sm:$0xf] %v818
            %855 = vst [vmem:[%s845 + $0x24] sm:$0xf] %v819
            %856 = vst [vmem:[%s845 + $0x28] sm:$0xf] %v820
            %857 = vst [vmem:[%s845 + $0x2c] sm:$0xf] %v821
            %858 = vst [vmem:[%s845 + $0x30] sm:$0xf] %v822
            %859 = vst [vmem:[%s845 + $0x34] sm:$0xf] %v823
            %860 = vst [vmem:[%s845 + $0x38] sm:$0xf] %v824
            %861 = vst [vmem:[%s845 + $0x3c] sm:$0xf] %v825
            %862 = vst [vmem:[%s845 + $0x40] sm:$0xf] %v826
            %863 = vst [vmem:[%s845 + $0x44] sm:$0xf] %v827
            %864 = vst [vmem:[%s845 + $0x48] sm:$0xf] %v828
            %865 = vst [vmem:[%s845 + $0x4c] sm:$0xf] %v829
            %866 = vst [vmem:[%s845 + $0x50] sm:$0xf] %v830
            %867 = vst [vmem:[%s845 + $0x54] sm:$0xf] %v831
            %868 = vst [vmem:[%s845 + $0x58] sm:$0xf] %v832
            %869 = vst [vmem:[%s845 + $0x5c] sm:$0xf] %v833
            %870 = vst [vmem:[%s845 + $0x60] sm:$0xf] %v834
            %871 = vst [vmem:[%s845 + $0x64] sm:$0xf] %v835
            %872 = vst [vmem:[%s845 + $0x68] sm:$0xf] %v836
            %873 = vst [vmem:[%s845 + $0x6c] sm:$0xf] %v837
            %874 = vst [vmem:[%s845 + $0x70] sm:$0xf] %v838
            %875 = vst [vmem:[%s845 + $0x74] sm:$0xf] %v839
            %876 = vst [vmem:[%s845 + $0x78] sm:$0xf] %v840
            %877 = vst [vmem:[%s845 + $0x7c] sm:$0xf] %v841
          $region100: #{tpu_custom_call.1} parent=95 // pred_fallthru
            _
          %p878 = scmp.gt.s32.totalorder %s34, 0
          // Predicated region
          $region101: #{tpu_custom_call.1} parent=95 // pred_check
            %p879 = pneg %p878
          $region102: #{tpu_custom_call.1} parent=95 // pred_check_branch
            %881 = sbr.rel (%p879) target = $region104
          $region103: #{tpu_custom_call.1} parent=95 // pred_region
            %s882 = sshra.s32 %s560, 3
            %s883 = sand.u32 %s560, 7
            %s884 = smul.addr %s882, 4
            %s885 = scalar_lea.vmem [#allocation3], %s884
            %v886 = vld [vmem:[%s885] sm:$0xf]
            %v887 = vld [vmem:[%s885 + $0x4] sm:$0xf]
            %v888 = vld [vmem:[%s885 + $0x8] sm:$0xf]
            %v889 = vld [vmem:[%s885 + $0xc] sm:$0xf]
            %v890 = vld [vmem:[%s885 + $0x10] sm:$0xf]
            %v891 = vld [vmem:[%s885 + $0x14] sm:$0xf]
            %v892 = vld [vmem:[%s885 + $0x18] sm:$0xf]
            %v893 = vld [vmem:[%s885 + $0x1c] sm:$0xf]
            %v894 = vld [vmem:[%s885 + $0x20] sm:$0xf]
            %v895 = vld [vmem:[%s885 + $0x24] sm:$0xf]
            %v896 = vld [vmem:[%s885 + $0x28] sm:$0xf]
            %v897 = vld [vmem:[%s885 + $0x2c] sm:$0xf]
            %v898 = vld [vmem:[%s885 + $0x30] sm:$0xf]
            %v899 = vld [vmem:[%s885 + $0x34] sm:$0xf]
            %v900 = vld [vmem:[%s885 + $0x38] sm:$0xf]
            %v901 = vld [vmem:[%s885 + $0x3c] sm:$0xf]
            %v902 = vld [vmem:[%s885 + $0x40] sm:$0xf]
            %v903 = vld [vmem:[%s885 + $0x44] sm:$0xf]
            %v904 = vld [vmem:[%s885 + $0x48] sm:$0xf]
            %v905 = vld [vmem:[%s885 + $0x4c] sm:$0xf]
            %v906 = vld [vmem:[%s885 + $0x50] sm:$0xf]
            %v907 = vld [vmem:[%s885 + $0x54] sm:$0xf]
            %v908 = vld [vmem:[%s885 + $0x58] sm:$0xf]
            %v909 = vld [vmem:[%s885 + $0x5c] sm:$0xf]
            %v910 = vld [vmem:[%s885 + $0x60] sm:$0xf]
            %v911 = vld [vmem:[%s885 + $0x64] sm:$0xf]
            %v912 = vld [vmem:[%s885 + $0x68] sm:$0xf]
            %v913 = vld [vmem:[%s885 + $0x6c] sm:$0xf]
            %v914 = vld [vmem:[%s885 + $0x70] sm:$0xf]
            %v915 = vld [vmem:[%s885 + $0x74] sm:$0xf]
            %v916 = vld [vmem:[%s885 + $0x78] sm:$0xf]
            %v917 = vld [vmem:[%s885 + $0x7c] sm:$0xf]
            %v918 = vld [vmem:[#allocation14] sm:$0xff]
            %v919 = vld [vmem:[#allocation14 + $0x8] sm:$0xff]
            %v920 = vld [vmem:[#allocation14 + $0x10] sm:$0xff]
            %v921 = vld [vmem:[#allocation14 + $0x18] sm:$0xff]
            %v922 = vld [vmem:[#allocation14 + $0x20] sm:$0xff]
            %v923 = vld [vmem:[#allocation14 + $0x28] sm:$0xff]
            %v924 = vld [vmem:[#allocation14 + $0x30] sm:$0xff]
            %v925 = vld [vmem:[#allocation14 + $0x38] sm:$0xff]
            %v926 = vld [vmem:[#allocation14 + $0x40] sm:$0xff]
            %v927 = vld [vmem:[#allocation14 + $0x48] sm:$0xff]
            %v928 = vld [vmem:[#allocation14 + $0x50] sm:$0xff]
            %v929 = vld [vmem:[#allocation14 + $0x58] sm:$0xff]
            %v930 = vld [vmem:[#allocation14 + $0x60] sm:$0xff]
            %v931 = vld [vmem:[#allocation14 + $0x68] sm:$0xff]
            %v932 = vld [vmem:[#allocation14 + $0x70] sm:$0xff]
            %v933 = vld [vmem:[#allocation14 + $0x78] sm:$0xff]
            %v966 = vunpack.c.l.b16 %v886
            %v967 = vunpack.c.l.b16 %v887
            %v968 = vunpack.c.l.b16 %v888
            %v969 = vunpack.c.l.b16 %v889
            %v970 = vunpack.c.l.b16 %v890
            %v971 = vunpack.c.l.b16 %v891
            %v972 = vunpack.c.l.b16 %v892
            %v973 = vunpack.c.l.b16 %v893
            %v974 = vunpack.c.l.b16 %v894
            %v975 = vunpack.c.l.b16 %v895
            %v976 = vunpack.c.l.b16 %v896
            %v977 = vunpack.c.l.b16 %v897
            %v978 = vunpack.c.l.b16 %v898
            %v979 = vunpack.c.l.b16 %v899
            %v980 = vunpack.c.l.b16 %v900
            %v981 = vunpack.c.l.b16 %v901
            %v982 = vunpack.c.l.b16 %v902
            %v983 = vunpack.c.l.b16 %v903
            %v984 = vunpack.c.l.b16 %v904
            %v985 = vunpack.c.l.b16 %v905
            %v986 = vunpack.c.l.b16 %v906
            %v987 = vunpack.c.l.b16 %v907
            %v988 = vunpack.c.l.b16 %v908
            %v989 = vunpack.c.l.b16 %v909
            %v990 = vunpack.c.l.b16 %v910
            %v991 = vunpack.c.l.b16 %v911
            %v992 = vunpack.c.l.b16 %v912
            %v993 = vunpack.c.l.b16 %v913
            %v994 = vunpack.c.l.b16 %v914
            %v995 = vunpack.c.l.b16 %v915
            %v996 = vunpack.c.l.b16 %v916
            %v997 = vunpack.c.l.b16 %v917
            %v998 = vpack.c.b16 %v967, %v966
            %v999 = vpack.c.b16 %v969, %v968
            %v1000 = vpack.c.b16 %v971, %v970
            %v1001 = vpack.c.b16 %v973, %v972
            %v1002 = vpack.c.b16 %v975, %v974
            %v1003 = vpack.c.b16 %v977, %v976
            %v1004 = vpack.c.b16 %v979, %v978
            %v1005 = vpack.c.b16 %v981, %v980
            %v1006 = vpack.c.b16 %v983, %v982
            %v1007 = vpack.c.b16 %v985, %v984
            %v1008 = vpack.c.b16 %v987, %v986
            %v1009 = vpack.c.b16 %v989, %v988
            %v1010 = vpack.c.b16 %v991, %v990
            %v1011 = vpack.c.b16 %v993, %v992
            %v1012 = vpack.c.b16 %v995, %v994
            %v1013 = vpack.c.b16 %v997, %v996
            %1030 = vmatpush.msra.mxu0 %v933
            %1031 = vmatpush.msra.mxu0 %v932
            %1032 = vmatpush.msra.mxu0 %v931
            %1033 = vmatpush.msra.mxu0 %v930
            %1034 = vmatpush.msra.mxu0 %v929
            %1035 = vmatpush.msra.mxu0 %v928
            %1036 = vmatpush.msra.mxu0 %v927
            %1037 = vmatpush.msra.mxu0 %v926
            %1038 = vmatpush.msra.mxu0 %v925
            %1039 = vmatpush.msra.mxu0 %v924
            %1040 = vmatpush.msra.mxu0 %v923
            %1041 = vmatpush.msra.mxu0 %v922
            %1042 = vmatpush.msra.mxu0 %v921
            %1043 = vmatpush.msra.mxu0 %v920
            %1044 = vmatpush.msra.mxu0 %v919
            %1045 = vmatpush.msra.mxu0 %v918
            %1046 = vmatmul.bf16.gmra.mxu0 %v998
            %v1047 = vpop.f32.mrf.mxu0
            %v1048 = vadd.f32 0.0, %v1047
            %v1049 = vpop.f32.mrf.mxu0
            %v1050 = vadd.f32 0.0, %v1049
            %1051 = vmatmul.bf16.gmra.mxu0 %v999
            %v1052 = vpop.f32.mrf.mxu0
            %v1053 = vadd.f32 0.0, %v1052
            %v1054 = vpop.f32.mrf.mxu0
            %v1055 = vadd.f32 0.0, %v1054
            %1056 = vmatmul.bf16.gmra.mxu0 %v1000
            %v1057 = vpop.f32.mrf.mxu0
            %v1058 = vadd.f32 0.0, %v1057
            %v1059 = vpop.f32.mrf.mxu0
            %v1060 = vadd.f32 0.0, %v1059
            %1061 = vmatmul.bf16.gmra.mxu0 %v1001
            %v1062 = vpop.f32.mrf.mxu0
            %v1063 = vadd.f32 0.0, %v1062
            %v1064 = vpop.f32.mrf.mxu0
            %v1065 = vadd.f32 0.0, %v1064
            %1066 = vmatmul.bf16.gmra.mxu0 %v1002
            %v1067 = vpop.f32.mrf.mxu0
            %v1068 = vadd.f32 0.0, %v1067
            %v1069 = vpop.f32.mrf.mxu0
            %v1070 = vadd.f32 0.0, %v1069
            %1071 = vmatmul.bf16.gmra.mxu0 %v1003
            %v1072 = vpop.f32.mrf.mxu0
            %v1073 = vadd.f32 0.0, %v1072
            %v1074 = vpop.f32.mrf.mxu0
            %v1075 = vadd.f32 0.0, %v1074
            %1076 = vmatmul.bf16.gmra.mxu0 %v1004
            %v1077 = vpop.f32.mrf.mxu0
            %v1078 = vadd.f32 0.0, %v1077
            %v1079 = vpop.f32.mrf.mxu0
            %v1080 = vadd.f32 0.0, %v1079
            %1081 = vmatmul.bf16.gmra.mxu0 %v1005
            %v1082 = vpop.f32.mrf.mxu0
            %v1083 = vadd.f32 0.0, %v1082
            %v1084 = vpop.f32.mrf.mxu0
            %v1085 = vadd.f32 0.0, %v1084
            %1086 = vmatmul.bf16.gmra.mxu0 %v1006
            %v1087 = vpop.f32.mrf.mxu0
            %v1088 = vadd.f32 0.0, %v1087
            %v1089 = vpop.f32.mrf.mxu0
            %v1090 = vadd.f32 0.0, %v1089
            %1091 = vmatmul.bf16.gmra.mxu0 %v1007
            %v1092 = vpop.f32.mrf.mxu0
            %v1093 = vadd.f32 0.0, %v1092
            %v1094 = vpop.f32.mrf.mxu0
            %v1095 = vadd.f32 0.0, %v1094
            %1096 = vmatmul.bf16.gmra.mxu0 %v1008
            %v1097 = vpop.f32.mrf.mxu0
            %v1098 = vadd.f32 0.0, %v1097
            %v1099 = vpop.f32.mrf.mxu0
            %v1100 = vadd.f32 0.0, %v1099
            %1101 = vmatmul.bf16.gmra.mxu0 %v1009
            %v1102 = vpop.f32.mrf.mxu0
            %v1103 = vadd.f32 0.0, %v1102
            %v1104 = vpop.f32.mrf.mxu0
            %v1105 = vadd.f32 0.0, %v1104
            %1106 = vmatmul.bf16.gmra.mxu0 %v1010
            %v1107 = vpop.f32.mrf.mxu0
            %v1108 = vadd.f32 0.0, %v1107
            %v1109 = vpop.f32.mrf.mxu0
            %v1110 = vadd.f32 0.0, %v1109
            %1111 = vmatmul.bf16.gmra.mxu0 %v1011
            %v1112 = vpop.f32.mrf.mxu0
            %v1113 = vadd.f32 0.0, %v1112
            %v1114 = vpop.f32.mrf.mxu0
            %v1115 = vadd.f32 0.0, %v1114
            %1116 = vmatmul.bf16.gmra.mxu0 %v1012
            %v1117 = vpop.f32.mrf.mxu0
            %v1118 = vadd.f32 0.0, %v1117
            %v1119 = vpop.f32.mrf.mxu0
            %v1120 = vadd.f32 0.0, %v1119
            %1121 = vmatmul.bf16.gmra.mxu0 %v1013
            %v1122 = vpop.f32.mrf.mxu0
            %v1123 = vadd.f32 0.0, %v1122
            %v1124 = vpop.f32.mrf.mxu0
            %v1125 = vadd.f32 0.0, %v1124
            %1126 = vdwg.mxu0
            %v1127 = vpack.c.bf16 %v1048, %v1048
            %v1128 = vpack.c.bf16 %v1050, %v1050
            %v1129 = vpack.c.bf16 %v1053, %v1053
            %v1130 = vpack.c.bf16 %v1055, %v1055
            %v1131 = vpack.c.bf16 %v1058, %v1058
            %v1132 = vpack.c.bf16 %v1060, %v1060
            %v1133 = vpack.c.bf16 %v1063, %v1063
            %v1134 = vpack.c.bf16 %v1065, %v1065
            %v1135 = vpack.c.bf16 %v1068, %v1068
            %v1136 = vpack.c.bf16 %v1070, %v1070
            %v1137 = vpack.c.bf16 %v1073, %v1073
            %v1138 = vpack.c.bf16 %v1075, %v1075
            %v1139 = vpack.c.bf16 %v1078, %v1078
            %v1140 = vpack.c.bf16 %v1080, %v1080
            %v1141 = vpack.c.bf16 %v1083, %v1083
            %v1142 = vpack.c.bf16 %v1085, %v1085
            %v1143 = vpack.c.bf16 %v1088, %v1088
            %v1144 = vpack.c.bf16 %v1090, %v1090
            %v1145 = vpack.c.bf16 %v1093, %v1093
            %v1146 = vpack.c.bf16 %v1095, %v1095
            %v1147 = vpack.c.bf16 %v1098, %v1098
            %v1148 = vpack.c.bf16 %v1100, %v1100
            %v1149 = vpack.c.bf16 %v1103, %v1103
            %v1150 = vpack.c.bf16 %v1105, %v1105
            %v1151 = vpack.c.bf16 %v1108, %v1108
            %v1152 = vpack.c.bf16 %v1110, %v1110
            %v1153 = vpack.c.bf16 %v1113, %v1113
            %v1154 = vpack.c.bf16 %v1115, %v1115
            %v1155 = vpack.c.bf16 %v1118, %v1118
            %v1156 = vpack.c.bf16 %v1120, %v1120
            %v1157 = vpack.c.bf16 %v1123, %v1123
            %v1158 = vpack.c.bf16 %v1125, %v1125
            %s1159 = smul.addr %s882, 4
            %s1160 = scalar_lea.vmem [#allocation2], %s1159
            %1161 = vst [vmem:[%s1160] sm:$0xf] %v1127
            %1162 = vst [vmem:[%s1160 + $0x4] sm:$0xf] %v1128
            %1163 = vst [vmem:[%s1160 + $0x8] sm:$0xf] %v1129
            %1164 = vst [vmem:[%s1160 + $0xc] sm:$0xf] %v1130
            %1165 = vst [vmem:[%s1160 + $0x10] sm:$0xf] %v1131
            %1166 = vst [vmem:[%s1160 + $0x14] sm:$0xf] %v1132
            %1167 = vst [vmem:[%s1160 + $0x18] sm:$0xf] %v1133
            %1168 = vst [vmem:[%s1160 + $0x1c] sm:$0xf] %v1134
            %1169 = vst [vmem:[%s1160 + $0x20] sm:$0xf] %v1135
            %1170 = vst [vmem:[%s1160 + $0x24] sm:$0xf] %v1136
            %1171 = vst [vmem:[%s1160 + $0x28] sm:$0xf] %v1137
            %1172 = vst [vmem:[%s1160 + $0x2c] sm:$0xf] %v1138
            %1173 = vst [vmem:[%s1160 + $0x30] sm:$0xf] %v1139
            %1174 = vst [vmem:[%s1160 + $0x34] sm:$0xf] %v1140
            %1175 = vst [vmem:[%s1160 + $0x38] sm:$0xf] %v1141
            %1176 = vst [vmem:[%s1160 + $0x3c] sm:$0xf] %v1142
            %1177 = vst [vmem:[%s1160 + $0x40] sm:$0xf] %v1143
            %1178 = vst [vmem:[%s1160 + $0x44] sm:$0xf] %v1144
            %1179 = vst [vmem:[%s1160 + $0x48] sm:$0xf] %v1145
            %1180 = vst [vmem:[%s1160 + $0x4c] sm:$0xf] %v1146
            %1181 = vst [vmem:[%s1160 + $0x50] sm:$0xf] %v1147
            %1182 = vst [vmem:[%s1160 + $0x54] sm:$0xf] %v1148
            %1183 = vst [vmem:[%s1160 + $0x58] sm:$0xf] %v1149
            %1184 = vst [vmem:[%s1160 + $0x5c] sm:$0xf] %v1150
            %1185 = vst [vmem:[%s1160 + $0x60] sm:$0xf] %v1151
            %1186 = vst [vmem:[%s1160 + $0x64] sm:$0xf] %v1152
            %1187 = vst [vmem:[%s1160 + $0x68] sm:$0xf] %v1153
            %1188 = vst [vmem:[%s1160 + $0x6c] sm:$0xf] %v1154
            %1189 = vst [vmem:[%s1160 + $0x70] sm:$0xf] %v1155
            %1190 = vst [vmem:[%s1160 + $0x74] sm:$0xf] %v1156
            %1191 = vst [vmem:[%s1160 + $0x78] sm:$0xf] %v1157
            %1192 = vst [vmem:[%s1160 + $0x7c] sm:$0xf] %v1158
          $region104: #{tpu_custom_call.1} parent=95 // pred_fallthru
            _
        $region96: #{tpu_custom_call.1} parent=55 // pred_fallthru
          _
        %p1193 = scmp.eq.s32.totalorder %s36, 0
        // Predicated region
        $region105: #{tpu_custom_call.1} parent=55 // pred_check
          %p1194 = pneg %p1193
        $region106: #{tpu_custom_call.1} parent=55 // pred_check_branch
          %1196 = sbr.rel (%p1194) target = $region108
        $region107: #{tpu_custom_call.1} parent=55 // pred_region
          %1197 = vst [vmem:[#allocation4] sm:$0xff] 0.0
          %1198 = vst [vmem:[#allocation4 + $0x8] sm:$0xff] 0.0
          %1199 = vst [vmem:[#allocation4 + $0x10] sm:$0xff] 0.0
          %1200 = vst [vmem:[#allocation4 + $0x18] sm:$0xff] 0.0
          %1201 = vst [vmem:[#allocation4 + $0x20] sm:$0xff] 0.0
          %1202 = vst [vmem:[#allocation4 + $0x28] sm:$0xff] 0.0
          %1203 = vst [vmem:[#allocation4 + $0x30] sm:$0xff] 0.0
          %1204 = vst [vmem:[#allocation4 + $0x38] sm:$0xff] 0.0
          %1205 = vst [vmem:[#allocation4 + $0x40] sm:$0xff] 0.0
          %1206 = vst [vmem:[#allocation4 + $0x48] sm:$0xff] 0.0
          %1207 = vst [vmem:[#allocation4 + $0x50] sm:$0xff] 0.0
          %1208 = vst [vmem:[#allocation4 + $0x58] sm:$0xff] 0.0
          %1209 = vst [vmem:[#allocation4 + $0x60] sm:$0xff] 0.0
          %1210 = vst [vmem:[#allocation4 + $0x68] sm:$0xff] 0.0
          %1211 = vst [vmem:[#allocation4 + $0x70] sm:$0xff] 0.0
          %1212 = vst [vmem:[#allocation4 + $0x78] sm:$0xff] 0.0
          %1213 = vst [vmem:[#allocation4 + $0x80] sm:$0xff] 0.0
          %1214 = vst [vmem:[#allocation4 + $0x88] sm:$0xff] 0.0
          %1215 = vst [vmem:[#allocation4 + $0x90] sm:$0xff] 0.0
          %1216 = vst [vmem:[#allocation4 + $0x98] sm:$0xff] 0.0
          %1217 = vst [vmem:[#allocation4 + $0xa0] sm:$0xff] 0.0
          %1218 = vst [vmem:[#allocation4 + $0xa8] sm:$0xff] 0.0
          %1219 = vst [vmem:[#allocation4 + $0xb0] sm:$0xff] 0.0
          %1220 = vst [vmem:[#allocation4 + $0xb8] sm:$0xff] 0.0
          %1221 = vst [vmem:[#allocation4 + $0xc0] sm:$0xff] 0.0
          %1222 = vst [vmem:[#allocation4 + $0xc8] sm:$0xff] 0.0
          %1223 = vst [vmem:[#allocation4 + $0xd0] sm:$0xff] 0.0
          %1224 = vst [vmem:[#allocation4 + $0xd8] sm:$0xff] 0.0
          %1225 = vst [vmem:[#allocation4 + $0xe0] sm:$0xff] 0.0
          %1226 = vst [vmem:[#allocation4 + $0xe8] sm:$0xff] 0.0
          %1227 = vst [vmem:[#allocation4 + $0xf0] sm:$0xff] 0.0
          %1228 = vst [vmem:[#allocation4 + $0xf8] sm:$0xff] 0.0
        $region108: #{tpu_custom_call.1} parent=55 // pred_fallthru
          _
        %v1229 = vld [vmem:[#allocation4] sm:$0xff]
        %v1230 = vld [vmem:[#allocation4 + $0x8] sm:$0xff]
        %v1231 = vld [vmem:[#allocation4 + $0x10] sm:$0xff]
        %v1232 = vld [vmem:[#allocation4 + $0x18] sm:$0xff]
        %v1233 = vld [vmem:[#allocation4 + $0x20] sm:$0xff]
        %v1234 = vld [vmem:[#allocation4 + $0x28] sm:$0xff]
        %v1235 = vld [vmem:[#allocation4 + $0x30] sm:$0xff]
        %v1236 = vld [vmem:[#allocation4 + $0x38] sm:$0xff]
        %v1237 = vld [vmem:[#allocation4 + $0x40] sm:$0xff]
        %v1238 = vld [vmem:[#allocation4 + $0x48] sm:$0xff]
        %v1239 = vld [vmem:[#allocation4 + $0x50] sm:$0xff]
        %v1240 = vld [vmem:[#allocation4 + $0x58] sm:$0xff]
        %v1241 = vld [vmem:[#allocation4 + $0x60] sm:$0xff]
        %v1242 = vld [vmem:[#allocation4 + $0x68] sm:$0xff]
        %v1243 = vld [vmem:[#allocation4 + $0x70] sm:$0xff]
        %v1244 = vld [vmem:[#allocation4 + $0x78] sm:$0xff]
        %v1245 = vld [vmem:[#allocation4 + $0x80] sm:$0xff]
        %v1246 = vld [vmem:[#allocation4 + $0x88] sm:$0xff]
        %v1247 = vld [vmem:[#allocation4 + $0x90] sm:$0xff]
        %v1248 = vld [vmem:[#allocation4 + $0x98] sm:$0xff]
        %v1249 = vld [vmem:[#allocation4 + $0xa0] sm:$0xff]
        %v1250 = vld [vmem:[#allocation4 + $0xa8] sm:$0xff]
        %v1251 = vld [vmem:[#allocation4 + $0xb0] sm:$0xff]
        %v1252 = vld [vmem:[#allocation4 + $0xb8] sm:$0xff]
        %v1253 = vld [vmem:[#allocation4 + $0xc0] sm:$0xff]
        %v1254 = vld [vmem:[#allocation4 + $0xc8] sm:$0xff]
        %v1255 = vld [vmem:[#allocation4 + $0xd0] sm:$0xff]
        %v1256 = vld [vmem:[#allocation4 + $0xd8] sm:$0xff]
        %v1257 = vld [vmem:[#allocation4 + $0xe0] sm:$0xff]
        %v1258 = vld [vmem:[#allocation4 + $0xe8] sm:$0xff]
        %v1259 = vld [vmem:[#allocation4 + $0xf0] sm:$0xff]
        %v1260 = vld [vmem:[#allocation4 + $0xf8] sm:$0xff]
        %v1261 = vld [vmem:[%s460] sm:$0xff]
        %v1262 = vld [vmem:[%s460 + $0x8] sm:$0xff]
        %v1263 = vld [vmem:[%s460 + $0x10] sm:$0xff]
        %v1264 = vld [vmem:[%s460 + $0x18] sm:$0xff]
        %v1265 = vld [vmem:[%s460 + $0x20] sm:$0xff]
        %v1266 = vld [vmem:[%s460 + $0x28] sm:$0xff]
        %v1267 = vld [vmem:[%s460 + $0x30] sm:$0xff]
        %v1268 = vld [vmem:[%s460 + $0x38] sm:$0xff]
        %v1269 = vld [vmem:[%s460 + $0x40] sm:$0xff]
        %v1270 = vld [vmem:[%s460 + $0x48] sm:$0xff]
        %v1271 = vld [vmem:[%s460 + $0x50] sm:$0xff]
        %v1272 = vld [vmem:[%s460 + $0x58] sm:$0xff]
        %v1273 = vld [vmem:[%s460 + $0x60] sm:$0xff]
        %v1274 = vld [vmem:[%s460 + $0x68] sm:$0xff]
        %v1275 = vld [vmem:[%s460 + $0x70] sm:$0xff]
        %v1276 = vld [vmem:[%s460 + $0x78] sm:$0xff]
        %v1277 = vld [vmem:[%s460 + $0x80] sm:$0xff]
        %v1278 = vld [vmem:[%s460 + $0x88] sm:$0xff]
        %v1279 = vld [vmem:[%s460 + $0x90] sm:$0xff]
        %v1280 = vld [vmem:[%s460 + $0x98] sm:$0xff]
        %v1281 = vld [vmem:[%s460 + $0xa0] sm:$0xff]
        %v1282 = vld [vmem:[%s460 + $0xa8] sm:$0xff]
        %v1283 = vld [vmem:[%s460 + $0xb0] sm:$0xff]
        %v1284 = vld [vmem:[%s460 + $0xb8] sm:$0xff]
        %v1285 = vld [vmem:[%s460 + $0xc0] sm:$0xff]
        %v1286 = vld [vmem:[%s460 + $0xc8] sm:$0xff]
        %v1287 = vld [vmem:[%s460 + $0xd0] sm:$0xff]
        %v1288 = vld [vmem:[%s460 + $0xd8] sm:$0xff]
        %v1289 = vld [vmem:[%s460 + $0xe0] sm:$0xff]
        %v1290 = vld [vmem:[%s460 + $0xe8] sm:$0xff]
        %v1291 = vld [vmem:[%s460 + $0xf0] sm:$0xff]
        %v1292 = vld [vmem:[%s460 + $0xf8] sm:$0xff]
        %s1293 = sshra.s32 %s560, 3
        %s1294 = sand.u32 %s560, 7
        %s1295 = smul.addr %s1293, 4
        %s1296 = scalar_lea.vmem [#allocation2], %s1295
        %v1297 = vld [vmem:[%s1296] sm:$0xf]
        %v1298 = vld [vmem:[%s1296 + $0x4] sm:$0xf]
        %v1299 = vld [vmem:[%s1296 + $0x8] sm:$0xf]
        %v1300 = vld [vmem:[%s1296 + $0xc] sm:$0xf]
        %v1301 = vld [vmem:[%s1296 + $0x10] sm:$0xf]
        %v1302 = vld [vmem:[%s1296 + $0x14] sm:$0xf]
        %v1303 = vld [vmem:[%s1296 + $0x18] sm:$0xf]
        %v1304 = vld [vmem:[%s1296 + $0x1c] sm:$0xf]
        %v1305 = vld [vmem:[%s1296 + $0x20] sm:$0xf]
        %v1306 = vld [vmem:[%s1296 + $0x24] sm:$0xf]
        %v1307 = vld [vmem:[%s1296 + $0x28] sm:$0xf]
        %v1308 = vld [vmem:[%s1296 + $0x2c] sm:$0xf]
        %v1309 = vld [vmem:[%s1296 + $0x30] sm:$0xf]
        %v1310 = vld [vmem:[%s1296 + $0x34] sm:$0xf]
        %v1311 = vld [vmem:[%s1296 + $0x38] sm:$0xf]
        %v1312 = vld [vmem:[%s1296 + $0x3c] sm:$0xf]
        %v1313 = vld [vmem:[%s1296 + $0x40] sm:$0xf]
        %v1314 = vld [vmem:[%s1296 + $0x44] sm:$0xf]
        %v1315 = vld [vmem:[%s1296 + $0x48] sm:$0xf]
        %v1316 = vld [vmem:[%s1296 + $0x4c] sm:$0xf]
        %v1317 = vld [vmem:[%s1296 + $0x50] sm:$0xf]
        %v1318 = vld [vmem:[%s1296 + $0x54] sm:$0xf]
        %v1319 = vld [vmem:[%s1296 + $0x58] sm:$0xf]
        %v1320 = vld [vmem:[%s1296 + $0x5c] sm:$0xf]
        %v1321 = vld [vmem:[%s1296 + $0x60] sm:$0xf]
        %v1322 = vld [vmem:[%s1296 + $0x64] sm:$0xf]
        %v1323 = vld [vmem:[%s1296 + $0x68] sm:$0xf]
        %v1324 = vld [vmem:[%s1296 + $0x6c] sm:$0xf]
        %v1325 = vld [vmem:[%s1296 + $0x70] sm:$0xf]
        %v1326 = vld [vmem:[%s1296 + $0x74] sm:$0xf]
        %v1327 = vld [vmem:[%s1296 + $0x78] sm:$0xf]
        %v1328 = vld [vmem:[%s1296 + $0x7c] sm:$0xf]
        %v1361 = vunpack.c.l.b16 %v1261
        %v1362 = vunpack.c.h.b16 %v1261
        %v1363 = vunpack.c.l.b16 %v1262
        %v1364 = vunpack.c.h.b16 %v1262
        %v1365 = vunpack.c.l.b16 %v1263
        %v1366 = vunpack.c.h.b16 %v1263
        %v1367 = vunpack.c.l.b16 %v1264
        %v1368 = vunpack.c.h.b16 %v1264
        %v1369 = vunpack.c.l.b16 %v1265
        %v1370 = vunpack.c.h.b16 %v1265
        %v1371 = vunpack.c.l.b16 %v1266
        %v1372 = vunpack.c.h.b16 %v1266
        %v1373 = vunpack.c.l.b16 %v1267
        %v1374 = vunpack.c.h.b16 %v1267
        %v1375 = vunpack.c.l.b16 %v1268
        %v1376 = vunpack.c.h.b16 %v1268
        %v1377 = vunpack.c.l.b16 %v1269
        %v1378 = vunpack.c.h.b16 %v1269
        %v1379 = vunpack.c.l.b16 %v1270
        %v1380 = vunpack.c.h.b16 %v1270
        %v1381 = vunpack.c.l.b16 %v1271
        %v1382 = vunpack.c.h.b16 %v1271
        %v1383 = vunpack.c.l.b16 %v1272
        %v1384 = vunpack.c.h.b16 %v1272
        %v1385 = vunpack.c.l.b16 %v1273
        %v1386 = vunpack.c.h.b16 %v1273
        %v1387 = vunpack.c.l.b16 %v1274
        %v1388 = vunpack.c.h.b16 %v1274
        %v1389 = vunpack.c.l.b16 %v1275
        %v1390 = vunpack.c.h.b16 %v1275
        %v1391 = vunpack.c.l.b16 %v1276
        %v1392 = vunpack.c.h.b16 %v1276
        %v1393 = vunpack.c.l.b16 %v1277
        %v1394 = vunpack.c.h.b16 %v1277
        %v1395 = vunpack.c.l.b16 %v1278
        %v1396 = vunpack.c.h.b16 %v1278
        %v1397 = vunpack.c.l.b16 %v1279
        %v1398 = vunpack.c.h.b16 %v1279
        %v1399 = vunpack.c.l.b16 %v1280
        %v1400 = vunpack.c.h.b16 %v1280
        %v1401 = vunpack.c.l.b16 %v1281
        %v1402 = vunpack.c.h.b16 %v1281
        %v1403 = vunpack.c.l.b16 %v1282
        %v1404 = vunpack.c.h.b16 %v1282
        %v1405 = vunpack.c.l.b16 %v1283
        %v1406 = vunpack.c.h.b16 %v1283
        %v1407 = vunpack.c.l.b16 %v1284
        %v1408 = vunpack.c.h.b16 %v1284
        %v1409 = vunpack.c.l.b16 %v1285
        %v1410 = vunpack.c.h.b16 %v1285
        %v1411 = vunpack.c.l.b16 %v1286
        %v1412 = vunpack.c.h.b16 %v1286
        %v1413 = vunpack.c.l.b16 %v1287
        %v1414 = vunpack.c.h.b16 %v1287
        %v1415 = vunpack.c.l.b16 %v1288
        %v1416 = vunpack.c.h.b16 %v1288
        %v1417 = vunpack.c.l.b16 %v1289
        %v1418 = vunpack.c.h.b16 %v1289
        %v1419 = vunpack.c.l.b16 %v1290
        %v1420 = vunpack.c.h.b16 %v1290
        %v1421 = vunpack.c.l.b16 %v1291
        %v1422 = vunpack.c.h.b16 %v1291
        %v1423 = vunpack.c.l.b16 %v1292
        %v1424 = vunpack.c.h.b16 %v1292
        %v1425 = vpack.c.b16 %v1363, %v1361
        %v1426 = vpack.c.b16 %v1364, %v1362
        %v1427 = vpack.c.b16 %v1367, %v1365
        %v1428 = vpack.c.b16 %v1368, %v1366
        %v1429 = vpack.c.b16 %v1371, %v1369
        %v1430 = vpack.c.b16 %v1372, %v1370
        %v1431 = vpack.c.b16 %v1375, %v1373
        %v1432 = vpack.c.b16 %v1376, %v1374
        %v1433 = vpack.c.b16 %v1379, %v1377
        %v1434 = vpack.c.b16 %v1380, %v1378
        %v1435 = vpack.c.b16 %v1383, %v1381
        %v1436 = vpack.c.b16 %v1384, %v1382
        %v1437 = vpack.c.b16 %v1387, %v1385
        %v1438 = vpack.c.b16 %v1388, %v1386
        %v1439 = vpack.c.b16 %v1391, %v1389
        %v1440 = vpack.c.b16 %v1392, %v1390
        %v1441 = vpack.c.b16 %v1395, %v1393
        %v1442 = vpack.c.b16 %v1396, %v1394
        %v1443 = vpack.c.b16 %v1399, %v1397
        %v1444 = vpack.c.b16 %v1400, %v1398
        %v1445 = vpack.c.b16 %v1403, %v1401
        %v1446 = vpack.c.b16 %v1404, %v1402
        %v1447 = vpack.c.b16 %v1407, %v1405
        %v1448 = vpack.c.b16 %v1408, %v1406
        %v1449 = vpack.c.b16 %v1411, %v1409
        %v1450 = vpack.c.b16 %v1412, %v1410
        %v1451 = vpack.c.b16 %v1415, %v1413
        %v1452 = vpack.c.b16 %v1416, %v1414
        %v1453 = vpack.c.b16 %v1419, %v1417
        %v1454 = vpack.c.b16 %v1420, %v1418
        %v1455 = vpack.c.b16 %v1423, %v1421
        %v1456 = vpack.c.b16 %v1424, %v1422
        %v1521 = vunpack.c.l.b16 %v1297
        %v1522 = vunpack.c.l.b16 %v1298
        %v1523 = vunpack.c.l.b16 %v1299
        %v1524 = vunpack.c.l.b16 %v1300
        %v1525 = vunpack.c.l.b16 %v1301
        %v1526 = vunpack.c.l.b16 %v1302
        %v1527 = vunpack.c.l.b16 %v1303
        %v1528 = vunpack.c.l.b16 %v1304
        %v1529 = vunpack.c.l.b16 %v1305
        %v1530 = vunpack.c.l.b16 %v1306
        %v1531 = vunpack.c.l.b16 %v1307
        %v1532 = vunpack.c.l.b16 %v1308
        %v1533 = vunpack.c.l.b16 %v1309
        %v1534 = vunpack.c.l.b16 %v1310
        %v1535 = vunpack.c.l.b16 %v1311
        %v1536 = vunpack.c.l.b16 %v1312
        %v1537 = vunpack.c.l.b16 %v1313
        %v1538 = vunpack.c.l.b16 %v1314
        %v1539 = vunpack.c.l.b16 %v1315
        %v1540 = vunpack.c.l.b16 %v1316
        %v1541 = vunpack.c.l.b16 %v1317
        %v1542 = vunpack.c.l.b16 %v1318
        %v1543 = vunpack.c.l.b16 %v1319
        %v1544 = vunpack.c.l.b16 %v1320
        %v1545 = vunpack.c.l.b16 %v1321
        %v1546 = vunpack.c.l.b16 %v1322
        %v1547 = vunpack.c.l.b16 %v1323
        %v1548 = vunpack.c.l.b16 %v1324
        %v1549 = vunpack.c.l.b16 %v1325
        %v1550 = vunpack.c.l.b16 %v1326
        %v1551 = vunpack.c.l.b16 %v1327
        %v1552 = vunpack.c.l.b16 %v1328
        %v1553 = vpack.c.b16 %v1522, %v1521
        %v1554 = vpack.c.b16 %v1524, %v1523
        %v1555 = vpack.c.b16 %v1526, %v1525
        %v1556 = vpack.c.b16 %v1528, %v1527
        %v1557 = vpack.c.b16 %v1530, %v1529
        %v1558 = vpack.c.b16 %v1532, %v1531
        %v1559 = vpack.c.b16 %v1534, %v1533
        %v1560 = vpack.c.b16 %v1536, %v1535
        %v1561 = vpack.c.b16 %v1538, %v1537
        %v1562 = vpack.c.b16 %v1540, %v1539
        %v1563 = vpack.c.b16 %v1542, %v1541
        %v1564 = vpack.c.b16 %v1544, %v1543
        %v1565 = vpack.c.b16 %v1546, %v1545
        %v1566 = vpack.c.b16 %v1548, %v1547
        %v1567 = vpack.c.b16 %v1550, %v1549
        %v1568 = vpack.c.b16 %v1552, %v1551
        %1585 = vmatpush.bf16.msra.mxu0 %v1560
        %1586 = vmatpush.bf16.msra.mxu0 %v1559
        %1587 = vmatpush.bf16.msra.mxu0 %v1558
        %1588 = vmatpush.bf16.msra.mxu0 %v1557
        %1589 = vmatpush.bf16.msra.mxu0 %v1556
        %1590 = vmatpush.bf16.msra.mxu0 %v1555
        %1591 = vmatpush.bf16.msra.mxu0 %v1554
        %1592 = vmatpush.bf16.msra.mxu0 %v1553
        %1593 = vmatmul.bf16.gmra.mxu0 %v1425
        %v1594 = vpop.f32.mrf.mxu0
        %v1595 = vadd.f32 0.0, %v1594
        %v1596 = vpop.f32.mrf.mxu0
        %v1597 = vadd.f32 0.0, %v1596
        %1598 = vmatmul.bf16.gmra.mxu0 %v1427
        %v1599 = vpop.f32.mrf.mxu0
        %v1600 = vadd.f32 0.0, %v1599
        %v1601 = vpop.f32.mrf.mxu0
        %v1602 = vadd.f32 0.0, %v1601
        %1603 = vmatmul.bf16.gmra.mxu0 %v1429
        %v1604 = vpop.f32.mrf.mxu0
        %v1605 = vadd.f32 0.0, %v1604
        %v1606 = vpop.f32.mrf.mxu0
        %v1607 = vadd.f32 0.0, %v1606
        %1608 = vmatmul.bf16.gmra.mxu0 %v1431
        %v1609 = vpop.f32.mrf.mxu0
        %v1610 = vadd.f32 0.0, %v1609
        %v1611 = vpop.f32.mrf.mxu0
        %v1612 = vadd.f32 0.0, %v1611
        %1613 = vmatmul.bf16.gmra.mxu0 %v1433
        %v1614 = vpop.f32.mrf.mxu0
        %v1615 = vadd.f32 0.0, %v1614
        %v1616 = vpop.f32.mrf.mxu0
        %v1617 = vadd.f32 0.0, %v1616
        %1618 = vmatmul.bf16.gmra.mxu0 %v1435
        %v1619 = vpop.f32.mrf.mxu0
        %v1620 = vadd.f32 0.0, %v1619
        %v1621 = vpop.f32.mrf.mxu0
        %v1622 = vadd.f32 0.0, %v1621
        %1623 = vmatmul.bf16.gmra.mxu0 %v1437
        %v1624 = vpop.f32.mrf.mxu0
        %v1625 = vadd.f32 0.0, %v1624
        %v1626 = vpop.f32.mrf.mxu0
        %v1627 = vadd.f32 0.0, %v1626
        %1628 = vmatmul.bf16.gmra.mxu0 %v1439
        %v1629 = vpop.f32.mrf.mxu0
        %v1630 = vadd.f32 0.0, %v1629
        %v1631 = vpop.f32.mrf.mxu0
        %v1632 = vadd.f32 0.0, %v1631
        %1633 = vmatmul.bf16.gmra.mxu0 %v1441
        %v1634 = vpop.f32.mrf.mxu0
        %v1635 = vadd.f32 0.0, %v1634
        %v1636 = vpop.f32.mrf.mxu0
        %v1637 = vadd.f32 0.0, %v1636
        %1638 = vmatmul.bf16.gmra.mxu0 %v1443
        %v1639 = vpop.f32.mrf.mxu0
        %v1640 = vadd.f32 0.0, %v1639
        %v1641 = vpop.f32.mrf.mxu0
        %v1642 = vadd.f32 0.0, %v1641
        %1643 = vmatmul.bf16.gmra.mxu0 %v1445
        %v1644 = vpop.f32.mrf.mxu0
        %v1645 = vadd.f32 0.0, %v1644
        %v1646 = vpop.f32.mrf.mxu0
        %v1647 = vadd.f32 0.0, %v1646
        %1648 = vmatmul.bf16.gmra.mxu0 %v1447
        %v1649 = vpop.f32.mrf.mxu0
        %v1650 = vadd.f32 0.0, %v1649
        %v1651 = vpop.f32.mrf.mxu0
        %v1652 = vadd.f32 0.0, %v1651
        %1653 = vmatmul.bf16.gmra.mxu0 %v1449
        %v1654 = vpop.f32.mrf.mxu0
        %v1655 = vadd.f32 0.0, %v1654
        %v1656 = vpop.f32.mrf.mxu0
        %v1657 = vadd.f32 0.0, %v1656
        %1658 = vmatmul.bf16.gmra.mxu0 %v1451
        %v1659 = vpop.f32.mrf.mxu0
        %v1660 = vadd.f32 0.0, %v1659
        %v1661 = vpop.f32.mrf.mxu0
        %v1662 = vadd.f32 0.0, %v1661
        %1663 = vmatmul.bf16.gmra.mxu0 %v1453
        %v1664 = vpop.f32.mrf.mxu0
        %v1665 = vadd.f32 0.0, %v1664
        %v1666 = vpop.f32.mrf.mxu0
        %v1667 = vadd.f32 0.0, %v1666
        %1668 = vmatmul.bf16.gmra.mxu0 %v1455
        %v1669 = vpop.f32.mrf.mxu0
        %v1670 = vadd.f32 0.0, %v1669
        %v1671 = vpop.f32.mrf.mxu0
        %v1672 = vadd.f32 0.0, %v1671
        %1673 = vdwg.mxu0
        %1674 = vmatpush.bf16.msra.mxu0 %v1568
        %1675 = vmatpush.bf16.msra.mxu0 %v1567
        %1676 = vmatpush.bf16.msra.mxu0 %v1566
        %1677 = vmatpush.bf16.msra.mxu0 %v1565
        %1678 = vmatpush.bf16.msra.mxu0 %v1564
        %1679 = vmatpush.bf16.msra.mxu0 %v1563
        %1680 = vmatpush.bf16.msra.mxu0 %v1562
        %1681 = vmatpush.bf16.msra.mxu0 %v1561
        %1682 = vmatmul.bf16.gmra.mxu0 %v1426
        %v1683 = vpop.f32.mrf.mxu0
        %v1684 = vadd.f32 %v1595, %v1683
        %v1685 = vpop.f32.mrf.mxu0
        %v1686 = vadd.f32 %v1597, %v1685
        %1687 = vmatmul.bf16.gmra.mxu0 %v1428
        %v1688 = vpop.f32.mrf.mxu0
        %v1689 = vadd.f32 %v1600, %v1688
        %v1690 = vpop.f32.mrf.mxu0
        %v1691 = vadd.f32 %v1602, %v1690
        %1692 = vmatmul.bf16.gmra.mxu0 %v1430
        %v1693 = vpop.f32.mrf.mxu0
        %v1694 = vadd.f32 %v1605, %v1693
        %v1695 = vpop.f32.mrf.mxu0
        %v1696 = vadd.f32 %v1607, %v1695
        %1697 = vmatmul.bf16.gmra.mxu0 %v1432
        %v1698 = vpop.f32.mrf.mxu0
        %v1699 = vadd.f32 %v1610, %v1698
        %v1700 = vpop.f32.mrf.mxu0
        %v1701 = vadd.f32 %v1612, %v1700
        %1702 = vmatmul.bf16.gmra.mxu0 %v1434
        %v1703 = vpop.f32.mrf.mxu0
        %v1704 = vadd.f32 %v1615, %v1703
        %v1705 = vpop.f32.mrf.mxu0
        %v1706 = vadd.f32 %v1617, %v1705
        %1707 = vmatmul.bf16.gmra.mxu0 %v1436
        %v1708 = vpop.f32.mrf.mxu0
        %v1709 = vadd.f32 %v1620, %v1708
        %v1710 = vpop.f32.mrf.mxu0
        %v1711 = vadd.f32 %v1622, %v1710
        %1712 = vmatmul.bf16.gmra.mxu0 %v1438
        %v1713 = vpop.f32.mrf.mxu0
        %v1714 = vadd.f32 %v1625, %v1713
        %v1715 = vpop.f32.mrf.mxu0
        %v1716 = vadd.f32 %v1627, %v1715
        %1717 = vmatmul.bf16.gmra.mxu0 %v1440
        %v1718 = vpop.f32.mrf.mxu0
        %v1719 = vadd.f32 %v1630, %v1718
        %v1720 = vpop.f32.mrf.mxu0
        %v1721 = vadd.f32 %v1632, %v1720
        %1722 = vmatmul.bf16.gmra.mxu0 %v1442
        %v1723 = vpop.f32.mrf.mxu0
        %v1724 = vadd.f32 %v1635, %v1723
        %v1725 = vpop.f32.mrf.mxu0
        %v1726 = vadd.f32 %v1637, %v1725
        %1727 = vmatmul.bf16.gmra.mxu0 %v1444
        %v1728 = vpop.f32.mrf.mxu0
        %v1729 = vadd.f32 %v1640, %v1728
        %v1730 = vpop.f32.mrf.mxu0
        %v1731 = vadd.f32 %v1642, %v1730
        %1732 = vmatmul.bf16.gmra.mxu0 %v1446
        %v1733 = vpop.f32.mrf.mxu0
        %v1734 = vadd.f32 %v1645, %v1733
        %v1735 = vpop.f32.mrf.mxu0
        %v1736 = vadd.f32 %v1647, %v1735
        %1737 = vmatmul.bf16.gmra.mxu0 %v1448
        %v1738 = vpop.f32.mrf.mxu0
        %v1739 = vadd.f32 %v1650, %v1738
        %v1740 = vpop.f32.mrf.mxu0
        %v1741 = vadd.f32 %v1652, %v1740
        %1742 = vmatmul.bf16.gmra.mxu0 %v1450
        %v1743 = vpop.f32.mrf.mxu0
        %v1744 = vadd.f32 %v1655, %v1743
        %v1745 = vpop.f32.mrf.mxu0
        %v1746 = vadd.f32 %v1657, %v1745
        %1747 = vmatmul.bf16.gmra.mxu0 %v1452
        %v1748 = vpop.f32.mrf.mxu0
        %v1749 = vadd.f32 %v1660, %v1748
        %v1750 = vpop.f32.mrf.mxu0
        %v1751 = vadd.f32 %v1662, %v1750
        %1752 = vmatmul.bf16.gmra.mxu0 %v1454
        %v1753 = vpop.f32.mrf.mxu0
        %v1754 = vadd.f32 %v1665, %v1753
        %v1755 = vpop.f32.mrf.mxu0
        %v1756 = vadd.f32 %v1667, %v1755
        %1757 = vmatmul.bf16.gmra.mxu0 %v1456
        %v1758 = vpop.f32.mrf.mxu0
        %v1759 = vadd.f32 %v1670, %v1758
        %v1760 = vpop.f32.mrf.mxu0
        %v1761 = vadd.f32 %v1672, %v1760
        %1762 = vdwg.mxu0
        %v1763 = vadd.f32 %v1229, %v1684
        %v1764 = vadd.f32 %v1230, %v1686
        %v1765 = vadd.f32 %v1231, %v1689
        %v1766 = vadd.f32 %v1232, %v1691
        %v1767 = vadd.f32 %v1233, %v1694
        %v1768 = vadd.f32 %v1234, %v1696
        %v1769 = vadd.f32 %v1235, %v1699
        %v1770 = vadd.f32 %v1236, %v1701
        %v1771 = vadd.f32 %v1237, %v1704
        %v1772 = vadd.f32 %v1238, %v1706
        %v1773 = vadd.f32 %v1239, %v1709
        %v1774 = vadd.f32 %v1240, %v1711
        %v1775 = vadd.f32 %v1241, %v1714
        %v1776 = vadd.f32 %v1242, %v1716
        %v1777 = vadd.f32 %v1243, %v1719
        %v1778 = vadd.f32 %v1244, %v1721
        %v1779 = vadd.f32 %v1245, %v1724
        %v1780 = vadd.f32 %v1246, %v1726
        %v1781 = vadd.f32 %v1247, %v1729
        %v1782 = vadd.f32 %v1248, %v1731
        %v1783 = vadd.f32 %v1249, %v1734
        %v1784 = vadd.f32 %v1250, %v1736
        %v1785 = vadd.f32 %v1251, %v1739
        %v1786 = vadd.f32 %v1252, %v1741
        %v1787 = vadd.f32 %v1253, %v1744
        %v1788 = vadd.f32 %v1254, %v1746
        %v1789 = vadd.f32 %v1255, %v1749
        %v1790 = vadd.f32 %v1256, %v1751
        %v1791 = vadd.f32 %v1257, %v1754
        %v1792 = vadd.f32 %v1258, %v1756
        %v1793 = vadd.f32 %v1259, %v1759
        %v1794 = vadd.f32 %v1260, %v1761
        %1795 = vst [vmem:[#allocation4] sm:$0xff] %v1763
        %1796 = vst [vmem:[#allocation4 + $0x8] sm:$0xff] %v1764
        %1797 = vst [vmem:[#allocation4 + $0x10] sm:$0xff] %v1765
        %1798 = vst [vmem:[#allocation4 + $0x18] sm:$0xff] %v1766
        %1799 = vst [vmem:[#allocation4 + $0x20] sm:$0xff] %v1767
        %1800 = vst [vmem:[#allocation4 + $0x28] sm:$0xff] %v1768
        %1801 = vst [vmem:[#allocation4 + $0x30] sm:$0xff] %v1769
        %1802 = vst [vmem:[#allocation4 + $0x38] sm:$0xff] %v1770
        %1803 = vst [vmem:[#allocation4 + $0x40] sm:$0xff] %v1771
        %1804 = vst [vmem:[#allocation4 + $0x48] sm:$0xff] %v1772
        %1805 = vst [vmem:[#allocation4 + $0x50] sm:$0xff] %v1773
        %1806 = vst [vmem:[#allocation4 + $0x58] sm:$0xff] %v1774
        %1807 = vst [vmem:[#allocation4 + $0x60] sm:$0xff] %v1775
        %1808 = vst [vmem:[#allocation4 + $0x68] sm:$0xff] %v1776
        %1809 = vst [vmem:[#allocation4 + $0x70] sm:$0xff] %v1777
        %1810 = vst [vmem:[#allocation4 + $0x78] sm:$0xff] %v1778
        %1811 = vst [vmem:[#allocation4 + $0x80] sm:$0xff] %v1779
        %1812 = vst [vmem:[#allocation4 + $0x88] sm:$0xff] %v1780
        %1813 = vst [vmem:[#allocation4 + $0x90] sm:$0xff] %v1781
        %1814 = vst [vmem:[#allocation4 + $0x98] sm:$0xff] %v1782
        %1815 = vst [vmem:[#allocation4 + $0xa0] sm:$0xff] %v1783
        %1816 = vst [vmem:[#allocation4 + $0xa8] sm:$0xff] %v1784
        %1817 = vst [vmem:[#allocation4 + $0xb0] sm:$0xff] %v1785
        %1818 = vst [vmem:[#allocation4 + $0xb8] sm:$0xff] %v1786
        %1819 = vst [vmem:[#allocation4 + $0xc0] sm:$0xff] %v1787
        %1820 = vst [vmem:[#allocation4 + $0xc8] sm:$0xff] %v1788
        %1821 = vst [vmem:[#allocation4 + $0xd0] sm:$0xff] %v1789
        %1822 = vst [vmem:[#allocation4 + $0xd8] sm:$0xff] %v1790
        %1823 = vst [vmem:[#allocation4 + $0xe0] sm:$0xff] %v1791
        %1824 = vst [vmem:[#allocation4 + $0xe8] sm:$0xff] %v1792
        %1825 = vst [vmem:[#allocation4 + $0xf0] sm:$0xff] %v1793
        %1826 = vst [vmem:[#allocation4 + $0xf8] sm:$0xff] %v1794
        %p1827 = scmp.eq.s32.totalorder %s36, 2
        // Predicated region
        $region109: #{tpu_custom_call.1} parent=55 // pred_check
          %p1828 = pneg %p1827
        $region110: #{tpu_custom_call.1} parent=55 // pred_check_branch
          %1830 = sbr.rel (%p1828) target = $region112
        $region111: #{tpu_custom_call.1} parent=55 // pred_region
          %p1831 = scmp.eq.s32.totalorder %s34, 0
          %v1832 = vld [vmem:[#allocation12] sm:$0x1]
          %v1833 = vld [vmem:[#allocation15] sm:$0x1]
          %s1834 = scalar_select %p1831, 1, 0
          %v1835 = vstv %s1834
          %vm1836 = vcmp.eq.s32.totalorder %v1835, 1
          %v1837 = vsel %vm1836, %v1832, %v1833
          %v1838 = vld [vmem:[#allocation4] sm:$0xff]
          %v1839 = vld [vmem:[#allocation4 + $0x8] sm:$0xff]
          %v1840 = vld [vmem:[#allocation4 + $0x10] sm:$0xff]
          %v1841 = vld [vmem:[#allocation4 + $0x18] sm:$0xff]
          %v1842 = vld [vmem:[#allocation4 + $0x20] sm:$0xff]
          %v1843 = vld [vmem:[#allocation4 + $0x28] sm:$0xff]
          %v1844 = vld [vmem:[#allocation4 + $0x30] sm:$0xff]
          %v1845 = vld [vmem:[#allocation4 + $0x38] sm:$0xff]
          %v1846 = vld [vmem:[#allocation4 + $0x40] sm:$0xff]
          %v1847 = vld [vmem:[#allocation4 + $0x48] sm:$0xff]
          %v1848 = vld [vmem:[#allocation4 + $0x50] sm:$0xff]
          %v1849 = vld [vmem:[#allocation4 + $0x58] sm:$0xff]
          %v1850 = vld [vmem:[#allocation4 + $0x60] sm:$0xff]
          %v1851 = vld [vmem:[#allocation4 + $0x68] sm:$0xff]
          %v1852 = vld [vmem:[#allocation4 + $0x70] sm:$0xff]
          %v1853 = vld [vmem:[#allocation4 + $0x78] sm:$0xff]
          %v1854 = vld [vmem:[#allocation4 + $0x80] sm:$0xff]
          %v1855 = vld [vmem:[#allocation4 + $0x88] sm:$0xff]
          %v1856 = vld [vmem:[#allocation4 + $0x90] sm:$0xff]
          %v1857 = vld [vmem:[#allocation4 + $0x98] sm:$0xff]
          %v1858 = vld [vmem:[#allocation4 + $0xa0] sm:$0xff]
          %v1859 = vld [vmem:[#allocation4 + $0xa8] sm:$0xff]
          %v1860 = vld [vmem:[#allocation4 + $0xb0] sm:$0xff]
          %v1861 = vld [vmem:[#allocation4 + $0xb8] sm:$0xff]
          %v1862 = vld [vmem:[#allocation4 + $0xc0] sm:$0xff]
          %v1863 = vld [vmem:[#allocation4 + $0xc8] sm:$0xff]
          %v1864 = vld [vmem:[#allocation4 + $0xd0] sm:$0xff]
          %v1865 = vld [vmem:[#allocation4 + $0xd8] sm:$0xff]
          %v1866 = vld [vmem:[#allocation4 + $0xe0] sm:$0xff]
          %v1867 = vld [vmem:[#allocation4 + $0xe8] sm:$0xff]
          %v1868 = vld [vmem:[#allocation4 + $0xf0] sm:$0xff]
          %v1869 = vld [vmem:[#allocation4 + $0xf8] sm:$0xff]
          %v1871 = vperm.slane %v1837, 0
          %v1873 = vadd.f32 %v1838, %v1871
          %v1874 = vadd.f32 %v1839, %v1871
          %v1875 = vadd.f32 %v1840, %v1871
          %v1876 = vadd.f32 %v1841, %v1871
          %v1877 = vadd.f32 %v1842, %v1871
          %v1878 = vadd.f32 %v1843, %v1871
          %v1879 = vadd.f32 %v1844, %v1871
          %v1880 = vadd.f32 %v1845, %v1871
          %v1881 = vadd.f32 %v1846, %v1871
          %v1882 = vadd.f32 %v1847, %v1871
          %v1883 = vadd.f32 %v1848, %v1871
          %v1884 = vadd.f32 %v1849, %v1871
          %v1885 = vadd.f32 %v1850, %v1871
          %v1886 = vadd.f32 %v1851, %v1871
          %v1887 = vadd.f32 %v1852, %v1871
          %v1888 = vadd.f32 %v1853, %v1871
          %v1889 = vadd.f32 %v1854, %v1871
          %v1890 = vadd.f32 %v1855, %v1871
          %v1891 = vadd.f32 %v1856, %v1871
          %v1892 = vadd.f32 %v1857, %v1871
          %v1893 = vadd.f32 %v1858, %v1871
          %v1894 = vadd.f32 %v1859, %v1871
          %v1895 = vadd.f32 %v1860, %v1871
          %v1896 = vadd.f32 %v1861, %v1871
          %v1897 = vadd.f32 %v1862, %v1871
          %v1898 = vadd.f32 %v1863, %v1871
          %v1899 = vadd.f32 %v1864, %v1871
          %v1900 = vadd.f32 %v1865, %v1871
          %v1901 = vadd.f32 %v1866, %v1871
          %v1902 = vadd.f32 %v1867, %v1871
          %v1903 = vadd.f32 %v1868, %v1871
          %v1904 = vadd.f32 %v1869, %v1871
          %v1905 = vmax.f32 %v1873, 0.0
          %v1906 = vmax.f32 %v1874, 0.0
          %v1907 = vmax.f32 %v1875, 0.0
          %v1908 = vmax.f32 %v1876, 0.0
          %v1909 = vmax.f32 %v1877, 0.0
          %v1910 = vmax.f32 %v1878, 0.0
          %v1911 = vmax.f32 %v1879, 0.0
          %v1912 = vmax.f32 %v1880, 0.0
          %v1913 = vmax.f32 %v1881, 0.0
          %v1914 = vmax.f32 %v1882, 0.0
          %v1915 = vmax.f32 %v1883, 0.0
          %v1916 = vmax.f32 %v1884, 0.0
          %v1917 = vmax.f32 %v1885, 0.0
          %v1918 = vmax.f32 %v1886, 0.0
          %v1919 = vmax.f32 %v1887, 0.0
          %v1920 = vmax.f32 %v1888, 0.0
          %v1921 = vmax.f32 %v1889, 0.0
          %v1922 = vmax.f32 %v1890, 0.0
          %v1923 = vmax.f32 %v1891, 0.0
          %v1924 = vmax.f32 %v1892, 0.0
          %v1925 = vmax.f32 %v1893, 0.0
          %v1926 = vmax.f32 %v1894, 0.0
          %v1927 = vmax.f32 %v1895, 0.0
          %v1928 = vmax.f32 %v1896, 0.0
          %v1929 = vmax.f32 %v1897, 0.0
          %v1930 = vmax.f32 %v1898, 0.0
          %v1931 = vmax.f32 %v1899, 0.0
          %v1932 = vmax.f32 %v1900, 0.0
          %v1933 = vmax.f32 %v1901, 0.0
          %v1934 = vmax.f32 %v1902, 0.0
          %v1935 = vmax.f32 %v1903, 0.0
          %v1936 = vmax.f32 %v1904, 0.0
          %s1937 = smul.u32 %s35, 256
          %v1938 = vpack.c.bf16 %v1905, %v1905
          %v1939 = vpack.c.bf16 %v1906, %v1906
          %v1940 = vpack.c.bf16 %v1907, %v1907
          %v1941 = vpack.c.bf16 %v1908, %v1908
          %v1942 = vpack.c.bf16 %v1909, %v1909
          %v1943 = vpack.c.bf16 %v1910, %v1910
          %v1944 = vpack.c.bf16 %v1911, %v1911
          %v1945 = vpack.c.bf16 %v1912, %v1912
          %v1946 = vpack.c.bf16 %v1913, %v1913
          %v1947 = vpack.c.bf16 %v1914, %v1914
          %v1948 = vpack.c.bf16 %v1915, %v1915
          %v1949 = vpack.c.bf16 %v1916, %v1916
          %v1950 = vpack.c.bf16 %v1917, %v1917
          %v1951 = vpack.c.bf16 %v1918, %v1918
          %v1952 = vpack.c.bf16 %v1919, %v1919
          %v1953 = vpack.c.bf16 %v1920, %v1920
          %v1954 = vpack.c.bf16 %v1921, %v1921
          %v1955 = vpack.c.bf16 %v1922, %v1922
          %v1956 = vpack.c.bf16 %v1923, %v1923
          %v1957 = vpack.c.bf16 %v1924, %v1924
          %v1958 = vpack.c.bf16 %v1925, %v1925
          %v1959 = vpack.c.bf16 %v1926, %v1926
          %v1960 = vpack.c.bf16 %v1927, %v1927
          %v1961 = vpack.c.bf16 %v1928, %v1928
          %v1962 = vpack.c.bf16 %v1929, %v1929
          %v1963 = vpack.c.bf16 %v1930, %v1930
          %v1964 = vpack.c.bf16 %v1931, %v1931
          %v1965 = vpack.c.bf16 %v1932, %v1932
          %v1966 = vpack.c.bf16 %v1933, %v1933
          %v1967 = vpack.c.bf16 %v1934, %v1934
          %v1968 = vpack.c.bf16 %v1935, %v1935
          %v1969 = vpack.c.bf16 %v1936, %v1936
          %s1970 = sshra.s32 %s1937, 3
          %s1971 = sand.u32 %s1937, 7
          %s1972 = smul.addr %s1970, 4
          %s1973 = scalar_lea.vmem [#allocation3], %s1972
          %1974 = vst [vmem:[%s1973] sm:$0xf] %v1938
          %1975 = vst [vmem:[%s1973 + $0x4] sm:$0xf] %v1939
          %1976 = vst [vmem:[%s1973 + $0x8] sm:$0xf] %v1940
          %1977 = vst [vmem:[%s1973 + $0xc] sm:$0xf] %v1941
          %1978 = vst [vmem:[%s1973 + $0x10] sm:$0xf] %v1942
          %1979 = vst [vmem:[%s1973 + $0x14] sm:$0xf] %v1943
          %1980 = vst [vmem:[%s1973 + $0x18] sm:$0xf] %v1944
          %1981 = vst [vmem:[%s1973 + $0x1c] sm:$0xf] %v1945
          %1982 = vst [vmem:[%s1973 + $0x20] sm:$0xf] %v1946
          %1983 = vst [vmem:[%s1973 + $0x24] sm:$0xf] %v1947
          %1984 = vst [vmem:[%s1973 + $0x28] sm:$0xf] %v1948
          %1985 = vst [vmem:[%s1973 + $0x2c] sm:$0xf] %v1949
          %1986 = vst [vmem:[%s1973 + $0x30] sm:$0xf] %v1950
          %1987 = vst [vmem:[%s1973 + $0x34] sm:$0xf] %v1951
          %1988 = vst [vmem:[%s1973 + $0x38] sm:$0xf] %v1952
          %1989 = vst [vmem:[%s1973 + $0x3c] sm:$0xf] %v1953
          %1990 = vst [vmem:[%s1973 + $0x40] sm:$0xf] %v1954
          %1991 = vst [vmem:[%s1973 + $0x44] sm:$0xf] %v1955
          %1992 = vst [vmem:[%s1973 + $0x48] sm:$0xf] %v1956
          %1993 = vst [vmem:[%s1973 + $0x4c] sm:$0xf] %v1957
          %1994 = vst [vmem:[%s1973 + $0x50] sm:$0xf] %v1958
          %1995 = vst [vmem:[%s1973 + $0x54] sm:$0xf] %v1959
          %1996 = vst [vmem:[%s1973 + $0x58] sm:$0xf] %v1960
          %1997 = vst [vmem:[%s1973 + $0x5c] sm:$0xf] %v1961
          %1998 = vst [vmem:[%s1973 + $0x60] sm:$0xf] %v1962
          %1999 = vst [vmem:[%s1973 + $0x64] sm:$0xf] %v1963
          %2000 = vst [vmem:[%s1973 + $0x68] sm:$0xf] %v1964
          %2001 = vst [vmem:[%s1973 + $0x6c] sm:$0xf] %v1965
          %2002 = vst [vmem:[%s1973 + $0x70] sm:$0xf] %v1966
          %2003 = vst [vmem:[%s1973 + $0x74] sm:$0xf] %v1967
          %2004 = vst [vmem:[%s1973 + $0x78] sm:$0xf] %v1968
          %2005 = vst [vmem:[%s1973 + $0x7c] sm:$0xf] %v1969
          %p2006 = scmp.eq.s32.totalorder %s34, 1
          // Predicated region
          $region113: #{tpu_custom_call.1} parent=111 // pred_check
            %p2007 = pneg %p2006
          $region114: #{tpu_custom_call.1} parent=111 // pred_check_branch
            %2009 = sbr.rel (%p2007) target = $region116
          $region115: #{tpu_custom_call.1} parent=111 // pred_region
            // Predicated region
            $region117: #{tpu_custom_call.1} parent=115 // pred_check
              %p2010 = pneg %p561
            $region118: #{tpu_custom_call.1} parent=115 // pred_check_branch
              %2012 = sbr.rel (%p2010) target = $region120
            $region119: #{tpu_custom_call.1} parent=115 // pred_region
              %2013 = vst [vmem:[#allocation5] sm:$0xff] 0.0
            $region120: #{tpu_custom_call.1} parent=115 // pred_fallthru
              _
            %v2014 = vld [vmem:[#allocation5] sm:$0xff]
            %v2015 = vld [vmem:[%s500] sm:$0xff]
            %v2017 = vunpack.c.l.b16 %v2015
            %v2018 = vunpack.c.h.b16 %v2015
            %v2019 = vpack.c.b16 %v2017, %v2017
            %v2020 = vpack.c.b16 %v2018, %v2018
            %2023 = vmatpush.msra.mxu0 %v1920
            %2024 = vmatpush.msra.mxu0 %v1919
            %2025 = vmatpush.msra.mxu0 %v1918
            %2026 = vmatpush.msra.mxu0 %v1917
            %2027 = vmatpush.msra.mxu0 %v1916
            %2028 = vmatpush.msra.mxu0 %v1915
            %2029 = vmatpush.msra.mxu0 %v1914
            %2030 = vmatpush.msra.mxu0 %v1913
            %2031 = vmatpush.msra.mxu0 %v1912
            %2032 = vmatpush.msra.mxu0 %v1911
            %2033 = vmatpush.msra.mxu0 %v1910
            %2034 = vmatpush.msra.mxu0 %v1909
            %2035 = vmatpush.msra.mxu0 %v1908
            %2036 = vmatpush.msra.mxu0 %v1907
            %2037 = vmatpush.msra.mxu0 %v1906
            %2038 = vmatpush.msra.mxu0 %v1905
            %2039 = vmatmul.bf16.gmra.mxu0 %v2019
            %v2040 = vpop.f32.mrf.mxu0
            %v2041 = vadd.f32 0.0, %v2040
            %v2042 = vpop.f32.mrf.mxu0
            %2043 = vdwg.mxu0
            %2044 = vmatpush.msra.mxu0 %v1936
            %2045 = vmatpush.msra.mxu0 %v1935
            %2046 = vmatpush.msra.mxu0 %v1934
            %2047 = vmatpush.msra.mxu0 %v1933
            %2048 = vmatpush.msra.mxu0 %v1932
            %2049 = vmatpush.msra.mxu0 %v1931
            %2050 = vmatpush.msra.mxu0 %v1930
            %2051 = vmatpush.msra.mxu0 %v1929
            %2052 = vmatpush.msra.mxu0 %v1928
            %2053 = vmatpush.msra.mxu0 %v1927
            %2054 = vmatpush.msra.mxu0 %v1926
            %2055 = vmatpush.msra.mxu0 %v1925
            %2056 = vmatpush.msra.mxu0 %v1924
            %2057 = vmatpush.msra.mxu0 %v1923
            %2058 = vmatpush.msra.mxu0 %v1922
            %2059 = vmatpush.msra.mxu0 %v1921
            %2060 = vmatmul.bf16.gmra.mxu0 %v2020
            %v2061 = vpop.f32.mrf.mxu0
            %v2062 = vadd.f32 %v2041, %v2061
            %v2063 = vpop.f32.mrf.mxu0
            %2064 = vdwg.mxu0
            %v2065 = vadd.f32 %v2014, %v2062
            %2066 = vst [vmem:[#allocation5] sm:$0xff] %v2065
          $region116: #{tpu_custom_call.1} parent=111 // pred_fallthru
            _
        $region112: #{tpu_custom_call.1} parent=55 // pred_fallthru
          _
        %p2067 = scmp.eq.s32.totalorder %s34, 1
        %p2068 = scmp.eq.s32.totalorder %s35, 2
        %p2069 = pnand %p2067, %p2068
        %p2070 = pneg %p2069
        %p2071 = pnand %p2070, %p1827
        %p2072 = pneg %p2071
        // Predicated region
        $region121: #{tpu_custom_call.1} parent=55 // pred_check
          _
        $region122: #{tpu_custom_call.1} parent=55 // pred_check_branch
          %2074 = sbr.rel (%p2071) target = $region124
        $region123: #{tpu_custom_call.1} parent=55 // pred_region
          %v2075 = vld [vmem:[#allocation5] sm:$0xff]
          %v2076 = vld [vmem:[#allocation18] sm:$0xff]
          %v2077 = vld [vmem:[#allocation18 + $0x8] sm:$0xff]
          %v2078 = vld [vmem:[#allocation18 + $0x10] sm:$0xff]
          %v2079 = vld [vmem:[#allocation18 + $0x18] sm:$0xff]
          %v2080 = vld [vmem:[#allocation18 + $0x20] sm:$0xff]
          %v2081 = vld [vmem:[#allocation18 + $0x28] sm:$0xff]
          %v2082 = vld [vmem:[#allocation18 + $0x30] sm:$0xff]
          %v2083 = vld [vmem:[#allocation18 + $0x38] sm:$0xff]
          %v2084 = vld [vmem:[#allocation18 + $0x40] sm:$0xff]
          %v2085 = vld [vmem:[#allocation18 + $0x48] sm:$0xff]
          %v2086 = vld [vmem:[#allocation18 + $0x50] sm:$0xff]
          %v2087 = vld [vmem:[#allocation18 + $0x58] sm:$0xff]
          %v2088 = vld [vmem:[#allocation18 + $0x60] sm:$0xff]
          %v2089 = vld [vmem:[#allocation18 + $0x68] sm:$0xff]
          %v2090 = vld [vmem:[#allocation18 + $0x70] sm:$0xff]
          %v2091 = vld [vmem:[#allocation18 + $0x78] sm:$0xff]
          %v2092 = vld [vmem:[#allocation19] sm:$0x1]
          %v2094 = vperm.slane %v2092, 0
          %2096 = vmatpush.msra.mxu0 %v2091
          %2097 = vmatpush.msra.mxu0 %v2090
          %2098 = vmatpush.msra.mxu0 %v2089
          %2099 = vmatpush.msra.mxu0 %v2088
          %2100 = vmatpush.msra.mxu0 %v2087
          %2101 = vmatpush.msra.mxu0 %v2086
          %2102 = vmatpush.msra.mxu0 %v2085
          %2103 = vmatpush.msra.mxu0 %v2084
          %2104 = vmatpush.msra.mxu0 %v2083
          %2105 = vmatpush.msra.mxu0 %v2082
          %2106 = vmatpush.msra.mxu0 %v2081
          %2107 = vmatpush.msra.mxu0 %v2080
          %2108 = vmatpush.msra.mxu0 %v2079
          %2109 = vmatpush.msra.mxu0 %v2078
          %2110 = vmatpush.msra.mxu0 %v2077
          %2111 = vmatpush.msra.mxu0 %v2076
          %2112 = vmatmul.f32.gmra.mxu0 %v2075
          %v2113 = vpop.f32.mrf.mxu0
          %v2114 = vadd.f32 %v2094, %v2113
          %2115 = vdwg.mxu0
          %2116 = vst [vmem:[#allocation20] sm:$0xff] %v2114
        $region124: #{tpu_custom_call.1} parent=55 // pred_fallthru
          _
        // Predicated region
        $region125: #{tpu_custom_call.1} parent=55 // pred_check
          %p2117 = pneg %p277
        $region126: #{tpu_custom_call.1} parent=55 // pred_check_branch
          %2119 = sbr.rel (%p2117) target = $region128
        $region127: #{tpu_custom_call.1} parent=55 // pred_region
          %2121 = vsyncadd [#allocation8], 0
          %s2123 = sshll.u32 [#allocation20], 4
          %s2124 = int_to_ptr.vmem [resolvable:$true] %s2123
          %s2125 = sshll.u32 %s9, 4
          %s2126 = int_to_ptr.hbm [resolvable:$true] %s2125
          %2128 = dma.vmem_to_hbm [thread:$0]  %s2124, 128, %s2126, [#allocation8]
        $region128: #{tpu_custom_call.1} parent=55 // pred_fallthru
          _
        // Predicated region
        $region129: #{tpu_custom_call.1} parent=55 // pred_check
          %p2129 = pneg %p277
        $region130: #{tpu_custom_call.1} parent=55 // pred_check_branch
          %2131 = sbr.rel (%p2129) target = $region132
        $region131: #{tpu_custom_call.1} parent=55 // pred_region
          %2133 = dma.done [#allocation8], 128
        $region132: #{tpu_custom_call.1} parent=55 // pred_fallthru
          _
      $region56: #{tpu_custom_call.1} parent=5 // pred_fallthru
        _
      %p2134 = scmp.le.s32.totalorder 2, %s24
      // Predicated region
      $region133: #{tpu_custom_call.1} parent=5 // pred_check
        %p2135 = pneg %p2134
      $region134: #{tpu_custom_call.1} parent=5 // pred_check_branch
        %2137 = sbr.rel (%p2135) target = $region136
      $region135: #{tpu_custom_call.1} parent=5 // pred_region
        %s2138 = ssub.s32 %s24, 2
      $region136: #{tpu_custom_call.1} parent=5 // pred_fallthru
        _
    $region6: #{tpu_custom_call.1} parent=1 // loop_footer
      %s28 = sadd.s32 1, %s24
    $region7: #{tpu_custom_call.1} parent=1 // loop_footer_branch
      %23 = sbr.rel target = $region3
    $region8: #{tpu_custom_call.1} parent=1 // loop_exit
      _
    %2139 = vsyncpa [#allocation7], 1
    %s2140 = scalar_lea.sflag [#allocation7], 1
    %2141 = vsyncpa %s2140, 1
    %2142 = vsyncpa [#allocation10], 1
    %s2143 = scalar_lea.sflag [#allocation10], 1
    %2144 = vsyncpa %s2143, 1
    %2145 = vsyncpa [#allocation13], 1
    %2146 = vsyncpa [#allocation16], 1
    %2147 = vsyncpa [#allocation8], 1
    %s2148 = scalar_lea.sflag [#allocation8], 1
    %2149 = vsyncpa %s2148, 1

</llo_original>
